<compile_context>
chip_gen: v7x
topology: tpu7x:2x2x1
jax: 0.10.0
libtpu: 0.0.40
codegen_flags: <defaults>
</compile_context>

<pallas_src>
import math

import jax
import jax.numpy as jnp
from jax.experimental import pallas as pl
from jax.experimental.pallas import tpu as pltpu

EMBEDDING_SIZE = 32
HIDDEN_SIZE = 64
VOCAB_SIZE = 26 + 1
VOCAB_PAD = 128          # lane-dense logits: vocab padded to one full vreg width


def _makemore_rnn_kernel(tokens_ref, proj_ref, start_ref, w_h_ref, b_h_ref,
                         w_lm_ref, b_lm_ref, out_ref, hid_ref):
    """One grid step = `TB` sequences, all T time steps.

    tokens_ref : (T, TB)          int32 time-major token-id block
    proj_ref   : (V, H)           f32   emb_table @ W_e (folded input projection)
    start_ref  : (1, H)           f32
    w_h_ref    : (H, H)           f32
    b_h_ref    : (1, H)           f32
    w_lm_ref   : (H, VOCAB_PAD)   f32   zero-padded LM head
    b_lm_ref   : (1, VOCAB_PAD)   f32   zero-padded
    out_ref    : (T*TB, VOCAB_PAD) f32  output block (time-major rows)
    hid_ref    : (T*TB, H)        f32   VMEM scratch for hidden states
    """
    T, TB = tokens_ref.shape
    V, H = proj_ref.shape

    # --- Embedding lookup + input projection for ALL time steps at once ---
    # onehot @ (emb_tbl @ W_e) == emb_tbl[tok] @ W_e ; cell bias folded in here
    # too, so only  h @ W_h  and tanh remain on the serial critical path.
    # NOTE: token ids are assumed to lie in [0, V); out-of-range ids would give
    # an all-zero one-hot row (PyTorch's Embedding would raise instead).
    tok = tokens_ref[...].reshape(T * TB, 1)
    iota = jax.lax.broadcasted_iota(jnp.int32, (T * TB, V), 1)
    onehot = (tok == iota).astype(jnp.float32)
    x = jnp.dot(onehot, proj_ref[...],
                preferred_element_type=jnp.float32) + b_h_ref[...]   # (T*TB, H)

    # --- Recurrence: h_t = tanh(x_t + h_{t-1} @ W_h) ---
    h = jnp.broadcast_to(start_ref[...], (TB, H))
    for i in range(T):                      # T is small & static -> unrolled
        h = jnp.tanh(
            x[i * TB:(i + 1) * TB, :]
            + jnp.dot(h, w_h_ref[...], preferred_element_type=jnp.float32))
        hid_ref[i * TB:(i + 1) * TB, :] = h   # contiguous sublane store

    # --- LM head over all hidden states (lane-dense, vocab padded to 128) ---
    out_ref[...] = (jnp.dot(hid_ref[...], w_lm_ref[...],
                            preferred_element_type=jnp.float32)
                    + b_lm_ref[...])


def prepare_params(params):
    """One-time PyTorch-layout -> kernel-layout conversion (not per call)."""
    emb_w, start, w_cell, b_cell, w_lm, b_lm = params
    # PyTorch Linear stores weight as (out, in); compute uses x @ W.T.
    w_e = jnp.transpose(w_cell[:, :EMBEDDING_SIZE])       # (E, H)
    w_h = jnp.transpose(w_cell[:, EMBEDDING_SIZE:])       # (H, H)
    proj = jnp.dot(emb_w, w_e)                            # (V, H) folded table
    b_h = b_cell.reshape(1, HIDDEN_SIZE)
    w_lm_pad = (jnp.zeros((HIDDEN_SIZE, VOCAB_PAD), jnp.float32)
                .at[:, :VOCAB_SIZE].set(jnp.transpose(w_lm)))
    b_lm_pad = (jnp.zeros((1, VOCAB_PAD), jnp.float32)
                .at[:, :VOCAB_SIZE].set(b_lm.reshape(1, VOCAB_SIZE)))
    return proj, start, w_h, b_h, w_lm_pad, b_lm_pad


def makemore_rnn_forward(tokens, prepared, batch_tile=None):
    """Forward pass: tokens (B, T) int -> logits (B, T, V) f32."""
    proj, start, w_h, b_h, w_lm_pad, b_lm_pad = prepared
    B, T = tokens.shape
    if batch_tile is None:
        # Split the batch into two grid blocks when possible so v7x's two
        # TensorCores each take half (dimension_semantics=("parallel",)).
        batch_tile = B // 2 if (B >= 2 and B % 2 == 0) else B
    assert B % batch_tile == 0
    TB = batch_tile
    G = B // TB

    # Time-major token layout: block g holds rows [g*T:(g+1)*T], lane = local b.
    tokens_tm = (tokens.astype(jnp.int32)
                 .reshape(G, TB, T).transpose(0, 2, 1).reshape(G * T, TB))

    def full_spec(arr):   # weights: whole array resident, same block every step
        return pl.BlockSpec(arr.shape, lambda g: (0, 0))

    out = pl.pallas_call(
        _makemore_rnn_kernel,
        grid=(G,),
        out_shape=jax.ShapeDtypeStruct((G * T * TB, VOCAB_PAD), jnp.float32),
        in_specs=[
            pl.BlockSpec((T, TB), lambda g: (g, 0)),      # tokens (time-major)
            full_spec(proj), full_spec(start), full_spec(w_h), full_spec(b_h),
            full_spec(w_lm_pad), full_spec(b_lm_pad),
        ],
        out_specs=pl.BlockSpec((T * TB, VOCAB_PAD), lambda g: (g, 0)),
        scratch_shapes=[pltpu.VMEM((T * TB, HIDDEN_SIZE), jnp.float32)],
        compiler_params=pltpu.CompilerParams(
            dimension_semantics=("parallel",)),
    )(tokens_tm, proj, start, w_h, b_h, w_lm_pad, b_lm_pad)

    # Lane-dense (rows, 128) slab -> (B, T, V); pure layout plumbing.
    return (out.reshape(G, T, TB, VOCAB_PAD)
               .transpose(0, 2, 1, 3)
               .reshape(B, T, VOCAB_PAD)[:, :, :VOCAB_SIZE])


def init_params(key):
    """Deterministic synthetic params matching the PyTorch module's shapes."""
    # TODO(synk): the Java-style Random(123) init sequence is not replicated;
    # shapes/semantics match, values come from jax.random.
    k1, k2, k3, k4, k5, k6 = jax.random.split(key, 6)
    emb_w = jax.random.normal(k1, (VOCAB_SIZE, EMBEDDING_SIZE), jnp.float32)
    start = jax.random.normal(k2, (1, HIDDEN_SIZE), jnp.float32)
    k_cell = 1.0 / math.sqrt(EMBEDDING_SIZE + HIDDEN_SIZE)
    w_cell = jax.random.uniform(k3, (HIDDEN_SIZE, EMBEDDING_SIZE + HIDDEN_SIZE),
                                jnp.float32, -k_cell, k_cell)
    b_cell = jax.random.uniform(k4, (HIDDEN_SIZE,), jnp.float32, -k_cell, k_cell)
    k_lm = 1.0 / math.sqrt(HIDDEN_SIZE)
    w_lm = jax.random.uniform(k5, (VOCAB_SIZE, HIDDEN_SIZE),
                              jnp.float32, -k_lm, k_lm)
    b_lm = jax.random.uniform(k6, (VOCAB_SIZE,), jnp.float32, -k_lm, k_lm)
    return emb_w, start, w_cell, b_cell, w_lm, b_lm


def reference_forward(tokens, params):
    """Pure-JAX reference mirroring the PyTorch forward exactly."""
    emb_w, start, w_cell, b_cell, w_lm, b_lm = params
    emb = emb_w[tokens]                                   # (B, T, E)
    h = jnp.broadcast_to(start, (tokens.shape[0], HIDDEN_SIZE))
    hs = []
    for i in range(tokens.shape[1]):
        xh = jnp.concatenate([emb[:, i, :], h], axis=1)   # (B, E+H)
        h = jnp.tanh(xh @ w_cell.T + b_cell)
        hs.append(h)
    hid = jnp.stack(hs, axis=1)                           # (B, T, H)
    return hid @ w_lm.T + b_lm                            # (B, T, V)


if __name__ == "__main__":
    key = jax.random.PRNGKey(0)
    kp, kx = jax.random.split(key)
    params = init_params(kp)
    prepared = prepare_params(params)          # one-time layout prep

    B, T = 2, 8
    tokens = jax.random.randint(kx, (B, T), 0, VOCAB_SIZE, dtype=jnp.int32)

    fwd = jax.jit(makemore_rnn_forward)
    logits = fwd(tokens, prepared)
    jax.block_until_ready(logits)

    ref = reference_forward(tokens, params)
    assert logits.shape == (B, T, VOCAB_SIZE), logits.shape
    assert jnp.allclose(logits, ref, atol=1e-4, rtol=1e-4), \
        float(jnp.max(jnp.abs(logits - ref)))
    print("KERNEL_OK")
</pallas_src>

<mosaic_0001>
module attributes {stable_mosaic.version = 11 : i64} {
  func.func @_makemore_rnn_kernel(%arg0: i32, %arg1: memref<8x1xi32, #tpu.memory_space<vmem>>, %arg2: memref<27x64xf32, #tpu.memory_space<vmem>>, %arg3: memref<1x64xf32, #tpu.memory_space<vmem>>, %arg4: memref<64x64xf32, #tpu.memory_space<vmem>>, %arg5: memref<1x64xf32, #tpu.memory_space<vmem>>, %arg6: memref<64x128xf32, #tpu.memory_space<vmem>>, %arg7: memref<1x128xf32, #tpu.memory_space<vmem>>, %arg8: memref<8x128xf32, #tpu.memory_space<vmem>>, %arg9: memref<8x64xf32, #tpu.memory_space<vmem>>) attributes {dimension_semantics = [#tpu.dimension_semantics<parallel>], iteration_bounds = array<i64: 2>, scalar_prefetch = 0 : i64, scratch_operands = 1 : i64, tpu.core_type = #tpu.core_type<tc>, window_params = [{transform_indices = @transform_0, window_bounds = array<i64: 8, 1>}, {pipeline_mode = #tpu.pipeline_mode<synchronous>, transform_indices = @transform_1, window_bounds = array<i64: 27, 64>}, {pipeline_mode = #tpu.pipeline_mode<synchronous>, transform_indices = @transform_2, window_bounds = array<i64: 1, 64>}, {pipeline_mode = #tpu.pipeline_mode<synchronous>, transform_indices = @transform_3, window_bounds = array<i64: 64, 64>}, {pipeline_mode = #tpu.pipeline_mode<synchronous>, transform_indices = @transform_4, window_bounds = array<i64: 1, 64>}, {pipeline_mode = #tpu.pipeline_mode<synchronous>, transform_indices = @transform_5, window_bounds = array<i64: 64, 128>}, {pipeline_mode = #tpu.pipeline_mode<synchronous>, transform_indices = @transform_6, window_bounds = array<i64: 1, 128>}, {transform_indices = @transform_7, window_bounds = array<i64: 8, 128>}]} {
    %c0 = arith.constant 0 : index
    %c0_0 = arith.constant 0 : index
    %0 = vector.load %arg1[%c0, %c0_0] : memref<8x1xi32, #tpu.memory_space<vmem>>, vector<8x1xi32>
    %1 = tpu.iota {dimensions = array<i32: 1>} : vector<8x27xi32>
    %2 = vector.broadcast %0 : vector<8x1xi32> to vector<8x27xi32>
    %3 = arith.cmpi eq, %2, %1 : vector<8x27xi32>
    %4 = arith.extui %3 : vector<8x27xi1> to vector<8x27xi32>
    %5 = arith.sitofp %4 : vector<8x27xi32> to vector<8x27xf32>
    %c0_1 = arith.constant 0 : index
    %c0_2 = arith.constant 0 : index
    %6 = vector.load %arg2[%c0_1, %c0_2] : memref<27x64xf32, #tpu.memory_space<vmem>>, vector<27x64xf32>
    %cst = arith.constant dense<0.000000e+00> : vector<8x64xf32>
    %7 = tpu.matmul %5, %6, %cst {dimension_numbers = #tpu.dot_dimension_numbers<[1], [0], [0], [1], [0, 0, 1, 1], [], []>} : vector<8x27xf32>, vector<27x64xf32>, vector<8x64xf32> -> vector<8x64xf32>
    %c0_3 = arith.constant 0 : index
    %c0_4 = arith.constant 0 : index
    %8 = vector.load %arg5[%c0_3, %c0_4] : memref<1x64xf32, #tpu.memory_space<vmem>>, vector<1x64xf32>
    %9 = vector.broadcast %8 : vector<1x64xf32> to vector<8x64xf32>
    %10 = arith.addf %7, %9 : vector<8x64xf32>
    %c0_5 = arith.constant 0 : index
    %c0_6 = arith.constant 0 : index
    %11 = vector.load %arg3[%c0_5, %c0_6] : memref<1x64xf32, #tpu.memory_space<vmem>>, vector<1x64xf32>
    %12 = vector.extract_strided_slice %10 {offsets = [0, 0], sizes = [1, 64], strides = [1, 1]} : vector<8x64xf32> to vector<1x64xf32>
    %c0_7 = arith.constant 0 : index
    %c0_8 = arith.constant 0 : index
    %13 = vector.load %arg4[%c0_7, %c0_8] : memref<64x64xf32, #tpu.memory_space<vmem>>, vector<64x64xf32>
    %cst_9 = arith.constant dense<0.000000e+00> : vector<1x64xf32>
    %14 = tpu.matmul %11, %13, %cst_9 {dimension_numbers = #tpu.dot_dimension_numbers<[1], [0], [0], [1], [0, 0, 1, 1], [], []>} : vector<1x64xf32>, vector<64x64xf32>, vector<1x64xf32> -> vector<1x64xf32>
    %15 = arith.addf %12, %14 : vector<1x64xf32>
    %16 = math.tanh %15 : vector<1x64xf32>
    %c0_10 = arith.constant 0 : index
    %c0_11 = arith.constant 0 : index
    %17 = vector.load %arg9[%c0_10, %c0_11] : memref<8x64xf32, #tpu.memory_space<vmem>>, vector<1x64xf32>
    tpu.vector_store %arg9[%c0_10, %c0_11], %16 {strides = array<i32>} : memref<8x64xf32, #tpu.memory_space<vmem>>, vector<1x64xf32>,
    %18 = vector.extract_strided_slice %10 {offsets = [1, 0], sizes = [1, 64], strides = [1, 1]} : vector<8x64xf32> to vector<1x64xf32>
    %c0_12 = arith.constant 0 : index
    %c0_13 = arith.constant 0 : index
    %19 = vector.load %arg4[%c0_12, %c0_13] : memref<64x64xf32, #tpu.memory_space<vmem>>, vector<64x64xf32>
    %cst_14 = arith.constant dense<0.000000e+00> : vector<1x64xf32>
    %20 = tpu.matmul %16, %19, %cst_14 {dimension_numbers = #tpu.dot_dimension_numbers<[1], [0], [0], [1], [0, 0, 1, 1], [], []>} : vector<1x64xf32>, vector<64x64xf32>, vector<1x64xf32> -> vector<1x64xf32>
    %21 = arith.addf %18, %20 : vector<1x64xf32>
    %22 = math.tanh %21 : vector<1x64xf32>
    %c1 = arith.constant 1 : index
    %c0_15 = arith.constant 0 : index
    %23 = vector.load %arg9[%c1, %c0_15] : memref<8x64xf32, #tpu.memory_space<vmem>>, vector<1x64xf32>
    tpu.vector_store %arg9[%c1, %c0_15], %22 {strides = array<i32>} : memref<8x64xf32, #tpu.memory_space<vmem>>, vector<1x64xf32>,
    %24 = vector.extract_strided_slice %10 {offsets = [2, 0], sizes = [1, 64], strides = [1, 1]} : vector<8x64xf32> to vector<1x64xf32>
    %c0_16 = arith.constant 0 : index
    %c0_17 = arith.constant 0 : index
    %25 = vector.load %arg4[%c0_16, %c0_17] : memref<64x64xf32, #tpu.memory_space<vmem>>, vector<64x64xf32>
    %cst_18 = arith.constant dense<0.000000e+00> : vector<1x64xf32>
    %26 = tpu.matmul %22, %25, %cst_18 {dimension_numbers = #tpu.dot_dimension_numbers<[1], [0], [0], [1], [0, 0, 1, 1], [], []>} : vector<1x64xf32>, vector<64x64xf32>, vector<1x64xf32> -> vector<1x64xf32>
    %27 = arith.addf %24, %26 : vector<1x64xf32>
    %28 = math.tanh %27 : vector<1x64xf32>
    %c2 = arith.constant 2 : index
    %c0_19 = arith.constant 0 : index
    %29 = vector.load %arg9[%c2, %c0_19] : memref<8x64xf32, #tpu.memory_space<vmem>>, vector<1x64xf32>
    tpu.vector_store %arg9[%c2, %c0_19], %28 {strides = array<i32>} : memref<8x64xf32, #tpu.memory_space<vmem>>, vector<1x64xf32>,
    %30 = vector.extract_strided_slice %10 {offsets = [3, 0], sizes = [1, 64], strides = [1, 1]} : vector<8x64xf32> to vector<1x64xf32>
    %c0_20 = arith.constant 0 : index
    %c0_21 = arith.constant 0 : index
    %31 = vector.load %arg4[%c0_20, %c0_21] : memref<64x64xf32, #tpu.memory_space<vmem>>, vector<64x64xf32>
    %cst_22 = arith.constant dense<0.000000e+00> : vector<1x64xf32>
    %32 = tpu.matmul %28, %31, %cst_22 {dimension_numbers = #tpu.dot_dimension_numbers<[1], [0], [0], [1], [0, 0, 1, 1], [], []>} : vector<1x64xf32>, vector<64x64xf32>, vector<1x64xf32> -> vector<1x64xf32>
    %33 = arith.addf %30, %32 : vector<1x64xf32>
    %34 = math.tanh %33 : vector<1x64xf32>
    %c3 = arith.constant 3 : index
    %c0_23 = arith.constant 0 : index
    %35 = vector.load %arg9[%c3, %c0_23] : memref<8x64xf32, #tpu.memory_space<vmem>>, vector<1x64xf32>
    tpu.vector_store %arg9[%c3, %c0_23], %34 {strides = array<i32>} : memref<8x64xf32, #tpu.memory_space<vmem>>, vector<1x64xf32>,
    %36 = vector.extract_strided_slice %10 {offsets = [4, 0], sizes = [1, 64], strides = [1, 1]} : vector<8x64xf32> to vector<1x64xf32>
    %c0_24 = arith.constant 0 : index
    %c0_25 = arith.constant 0 : index
    %37 = vector.load %arg4[%c0_24, %c0_25] : memref<64x64xf32, #tpu.memory_space<vmem>>, vector<64x64xf32>
    %cst_26 = arith.constant dense<0.000000e+00> : vector<1x64xf32>
    %38 = tpu.matmul %34, %37, %cst_26 {dimension_numbers = #tpu.dot_dimension_numbers<[1], [0], [0], [1], [0, 0, 1, 1], [], []>} : vector<1x64xf32>, vector<64x64xf32>, vector<1x64xf32> -> vector<1x64xf32>
    %39 = arith.addf %36, %38 : vector<1x64xf32>
    %40 = math.tanh %39 : vector<1x64xf32>
    %c4 = arith.constant 4 : index
    %c0_27 = arith.constant 0 : index
    %41 = vector.load %arg9[%c4, %c0_27] : memref<8x64xf32, #tpu.memory_space<vmem>>, vector<1x64xf32>
    tpu.vector_store %arg9[%c4, %c0_27], %40 {strides = array<i32>} : memref<8x64xf32, #tpu.memory_space<vmem>>, vector<1x64xf32>,
    %42 = vector.extract_strided_slice %10 {offsets = [5, 0], sizes = [1, 64], strides = [1, 1]} : vector<8x64xf32> to vector<1x64xf32>
    %c0_28 = arith.constant 0 : index
    %c0_29 = arith.constant 0 : index
    %43 = vector.load %arg4[%c0_28, %c0_29] : memref<64x64xf32, #tpu.memory_space<vmem>>, vector<64x64xf32>
    %cst_30 = arith.constant dense<0.000000e+00> : vector<1x64xf32>
    %44 = tpu.matmul %40, %43, %cst_30 {dimension_numbers = #tpu.dot_dimension_numbers<[1], [0], [0], [1], [0, 0, 1, 1], [], []>} : vector<1x64xf32>, vector<64x64xf32>, vector<1x64xf32> -> vector<1x64xf32>
    %45 = arith.addf %42, %44 : vector<1x64xf32>
    %46 = math.tanh %45 : vector<1x64xf32>
    %c5 = arith.constant 5 : index
    %c0_31 = arith.constant 0 : index
    %47 = vector.load %arg9[%c5, %c0_31] : memref<8x64xf32, #tpu.memory_space<vmem>>, vector<1x64xf32>
    tpu.vector_store %arg9[%c5, %c0_31], %46 {strides = array<i32>} : memref<8x64xf32, #tpu.memory_space<vmem>>, vector<1x64xf32>,
    %48 = vector.extract_strided_slice %10 {offsets = [6, 0], sizes = [1, 64], strides = [1, 1]} : vector<8x64xf32> to vector<1x64xf32>
    %c0_32 = arith.constant 0 : index
    %c0_33 = arith.constant 0 : index
    %49 = vector.load %arg4[%c0_32, %c0_33] : memref<64x64xf32, #tpu.memory_space<vmem>>, vector<64x64xf32>
    %cst_34 = arith.constant dense<0.000000e+00> : vector<1x64xf32>
    %50 = tpu.matmul %46, %49, %cst_34 {dimension_numbers = #tpu.dot_dimension_numbers<[1], [0], [0], [1], [0, 0, 1, 1], [], []>} : vector<1x64xf32>, vector<64x64xf32>, vector<1x64xf32> -> vector<1x64xf32>
    %51 = arith.addf %48, %50 : vector<1x64xf32>
    %52 = math.tanh %51 : vector<1x64xf32>
    %c6 = arith.constant 6 : index
    %c0_35 = arith.constant 0 : index
    %53 = vector.load %arg9[%c6, %c0_35] : memref<8x64xf32, #tpu.memory_space<vmem>>, vector<1x64xf32>
    tpu.vector_store %arg9[%c6, %c0_35], %52 {strides = array<i32>} : memref<8x64xf32, #tpu.memory_space<vmem>>, vector<1x64xf32>,
    %54 = vector.extract_strided_slice %10 {offsets = [7, 0], sizes = [1, 64], strides = [1, 1]} : vector<8x64xf32> to vector<1x64xf32>
    %c0_36 = arith.constant 0 : index
    %c0_37 = arith.constant 0 : index
    %55 = vector.load %arg4[%c0_36, %c0_37] : memref<64x64xf32, #tpu.memory_space<vmem>>, vector<64x64xf32>
    %cst_38 = arith.constant dense<0.000000e+00> : vector<1x64xf32>
    %56 = tpu.matmul %52, %55, %cst_38 {dimension_numbers = #tpu.dot_dimension_numbers<[1], [0], [0], [1], [0, 0, 1, 1], [], []>} : vector<1x64xf32>, vector<64x64xf32>, vector<1x64xf32> -> vector<1x64xf32>
    %57 = arith.addf %54, %56 : vector<1x64xf32>
    %58 = math.tanh %57 : vector<1x64xf32>
    %c7 = arith.constant 7 : index
    %c0_39 = arith.constant 0 : index
    %59 = vector.load %arg9[%c7, %c0_39] : memref<8x64xf32, #tpu.memory_space<vmem>>, vector<1x64xf32>
    tpu.vector_store %arg9[%c7, %c0_39], %58 {strides = array<i32>} : memref<8x64xf32, #tpu.memory_space<vmem>>, vector<1x64xf32>,
    %c0_40 = arith.constant 0 : index
    %c0_41 = arith.constant 0 : index
    %60 = vector.load %arg9[%c0_40, %c0_41] : memref<8x64xf32, #tpu.memory_space<vmem>>, vector<8x64xf32>
    %c0_42 = arith.constant 0 : index
    %c0_43 = arith.constant 0 : index
    %61 = vector.load %arg6[%c0_42, %c0_43] : memref<64x128xf32, #tpu.memory_space<vmem>>, vector<64x128xf32>
    %cst_44 = arith.constant dense<0.000000e+00> : vector<8x128xf32>
    %62 = tpu.matmul %60, %61, %cst_44 {dimension_numbers = #tpu.dot_dimension_numbers<[1], [0], [0], [1], [0, 0, 1, 1], [], []>} : vector<8x64xf32>, vector<64x128xf32>, vector<8x128xf32> -> vector<8x128xf32>
    %c0_45 = arith.constant 0 : index
    %c0_46 = arith.constant 0 : index
    %63 = vector.load %arg7[%c0_45, %c0_46] : memref<1x128xf32, #tpu.memory_space<vmem>>, vector<1x128xf32>
    %64 = vector.broadcast %63 : vector<1x128xf32> to vector<8x128xf32>
    %65 = arith.addf %62, %64 : vector<8x128xf32>
    %c0_47 = arith.constant 0 : index
    %c0_48 = arith.constant 0 : index
    %66 = vector.load %arg8[%c0_47, %c0_48] : memref<8x128xf32, #tpu.memory_space<vmem>>, vector<8x128xf32>
    tpu.vector_store %arg8[%c0_47, %c0_48], %65 {strides = array<i32>} : memref<8x128xf32, #tpu.memory_space<vmem>>, vector<8x128xf32>,
    return
  }
  func.func @transform_0(%arg0: i32) -> (i32, i32) {
    %c0_i32 = arith.constant 0 : i32
    %c0_i32_0 = arith.constant 0 : i32
    return %arg0, %c0_i32 : i32, i32
  }
  func.func @transform_1(%arg0: i32) -> (i32, i32) {
    %c0_i32 = arith.constant 0 : i32
    %c0_i32_0 = arith.constant 0 : i32
    %c0_i32_1 = arith.constant 0 : i32
    return %c0_i32, %c0_i32_0 : i32, i32
  }
  func.func @transform_2(%arg0: i32) -> (i32, i32) {
    %c0_i32 = arith.constant 0 : i32
    %c0_i32_0 = arith.constant 0 : i32
    %c0_i32_1 = arith.constant 0 : i32
    return %c0_i32, %c0_i32_0 : i32, i32
  }
  func.func @transform_3(%arg0: i32) -> (i32, i32) {
    %c0_i32 = arith.constant 0 : i32
    %c0_i32_0 = arith.constant 0 : i32
    %c0_i32_1 = arith.constant 0 : i32
    return %c0_i32, %c0_i32_0 : i32, i32
  }
  func.func @transform_4(%arg0: i32) -> (i32, i32) {
    %c0_i32 = arith.constant 0 : i32
    %c0_i32_0 = arith.constant 0 : i32
    %c0_i32_1 = arith.constant 0 : i32
    return %c0_i32, %c0_i32_0 : i32, i32
  }
  func.func @transform_5(%arg0: i32) -> (i32, i32) {
    %c0_i32 = arith.constant 0 : i32
    %c0_i32_0 = arith.constant 0 : i32
    %c0_i32_1 = arith.constant 0 : i32
    return %c0_i32, %c0_i32_0 : i32, i32
  }
  func.func @transform_6(%arg0: i32) -> (i32, i32) {
    %c0_i32 = arith.constant 0 : i32
    %c0_i32_0 = arith.constant 0 : i32
    %c0_i32_1 = arith.constant 0 : i32
    return %c0_i32, %c0_i32_0 : i32, i32
  }
  func.func @transform_7(%arg0: i32) -> (i32, i32) {
    %c0_i32 = arith.constant 0 : i32
    %c0_i32_0 = arith.constant 0 : i32
    return %arg0, %c0_i32 : i32, i32
  }
}

</mosaic_0001>

<llo_original>
// kernel: makemore_rnn_forward.1
$region0: #{makemore_rnn_forward.1}
  #allocation0 [shape = 'u32[]', space=smem, size = 0x4, offset = 0x4, fixed_abs, tag = 'smem constant byte address 0x4 - core index']
  #allocation1 [shape = 'u32[144,128]{1,0:T(1,128)}', space=vmem, size = 0x12000, scoped, tag = 'internal scratch']
  #allocation2 [shape = 'f32[8,64]{1,0:T(8,128)}', space=vmem, size = 0x1000, scoped, tag = 'scratch operand']
  %s0 = inlined_call_operand.vmem [shape: s32[16,1], index: 0, kind: input, shape index: {}]
  %s1 = inlined_call_operand.hbm [shape: f32[27,64], index: 1, kind: input, shape index: {}]
  %s2 = inlined_call_operand.vmem [shape: f32[1,64], index: 2, kind: input, shape index: {}]
  %s3 = inlined_call_operand.hbm [shape: f32[64,64], index: 3, kind: input, shape index: {}]
  %s4 = inlined_call_operand.vmem [shape: f32[1,64], index: 4, kind: input, shape index: {}]
  %s5 = inlined_call_operand.hbm [shape: f32[64,128], index: 5, kind: input, shape index: {}]
  %s6 = inlined_call_operand.vmem [shape: f32[1,128], index: 6, kind: input, shape index: {}]
  %s7 = inlined_call_operand.hbm [shape: f32[16,128], index: 7, kind: output, shape index: {}]
  %s8 = sld [smem:[#allocation0]]
  $region73: #{makemore_rnn_forward.1} parent=0
    _
  %s10 = ssub.s32 1, %s8
  %s11 = scalar_select 0, %s10, %s8
  $region1: #{makemore_rnn_forward.1} parent=0
    #allocation3 [shape = 'u8[16384]{0}', space=vmem, size = 0x4000, scoped, tag = 'input window, operand 1, single buffered']
    #allocation4 [shape = 's32[2]{0}', space=sflag, size = 0x8, scoped, tag = 'scoped memory for makemore_rnn_forward.1']
    #allocation5 [shape = 's32[2]{0}', space=sflag, size = 0x8, scoped, tag = 'scoped memory for makemore_rnn_forward.1']
    #allocation6 [shape = 'u8[32768]{0}', space=vmem, size = 0x8000, scoped, tag = 'input window, operand 3, single buffered']
    #allocation7 [shape = 's32[1]{0}', space=sflag, size = 0x4, scoped, tag = 'scoped memory for makemore_rnn_forward.1']
    #allocation8 [shape = 'u8[32768]{0}', space=vmem, size = 0x8000, scoped, tag = 'input window, operand 5, single buffered']
    #allocation9 [shape = 'u8[8192]{0}', space=vmem, size = 0x2000, scoped, tag = 'output window, operand 0']
    %12 = vsyncpa [#allocation4], 0
    %13 = vsyncpa [#allocation7], 0
    %14 = vsyncpa [#allocation5], 0
    %s15 = scalar_lea.sflag [#allocation5], 1
    %16 = vsyncpa %s15, 0
    loop: start=0, step=1, limit=4
    $region2: #{makemore_rnn_forward.1} parent=1 // loop_pre_header
      _
    $region3: #{makemore_rnn_forward.1} parent=1 // loop_header
      %s18 = sphi 0, %s22
      %p19 = scmp.ge.s32.totalorder %s18, 4
      %s28 = sphi 0, %s30
      %s31 = sphi 0, %s28
      %s32 = sphi 0, %s31
      %s48 = sphi 0, %s32
      %s52 = sphi 0, %s52
      %s54 = sphi 0, %s52
      %s55 = sphi 0, %s54
      %s69 = sphi 0, %s55
      %s73 = sphi 0, %s73
      %s75 = sphi 0, %s73
      %s76 = sphi 0, %s75
      %s90 = sphi 0, %s76
      %s94 = sphi 0, %s94
      %s96 = sphi 0, %s94
      %s97 = sphi 0, %s96
      %s111 = sphi 0, %s97
      %s115 = sphi 0, %s115
      %s117 = sphi 0, %s115
      %s118 = sphi 0, %s117
      %s132 = sphi 0, %s118
      %s136 = sphi 0, %s136
      %s138 = sphi 0, %s136
      %s139 = sphi 0, %s138
      %s153 = sphi 0, %s139
      %s157 = sphi 0, %s157
      %s159 = sphi 0, %s157
      %s160 = sphi 0, %s159
      %s174 = sphi 0, %s160
      %s180 = sphi 0, %s182
      %s183 = sphi 0, %s180
      %s184 = sphi 0, %s183
      %s200 = sphi 0, %s184
    $region4: #{makemore_rnn_forward.1} parent=1 // loop_header_branch
      %21 = sbr.rel (%p19) target = $region8
    $region5: #{makemore_rnn_forward.1} parent=1 // loop_body
      %s23 = ssub.s32 %s18, 1
      %s24 = ssub.s32 %s18, 2
      %s25 = sadd.s32 %s18, 1
      %s26 = ssub.s32 %s18, %s25
      %p27 = scmp.eq.s32.totalorder %s26, 0
      %s29 = sadd.s32 %s28, 1
      %s30 = scalar_select %p27, %s28, %s29
      %p33 = pneg %p27
      %p34 = scmp.eq.s32.totalorder %s18, 1
      %p35 = por %p33, %p34
      %p36 = scmp.ne.s32.totalorder %s28, %s31
      %p37 = scmp.eq.s32.totalorder %s18, 0
      %p38 = por %p36, %p37
      %p39 = scmp.ne.s32.totalorder %s28, %s31
      %p40 = scmp.eq.s32.totalorder %s23, 1
      %p41 = por %p39, %p40
      %p42 = scmp.ne.s32.totalorder %s31, %s32
      %p43 = scmp.eq.s32.totalorder %s23, 0
      %p44 = por %p42, %p43
      %p45 = scmp.ne.s32.totalorder %s31, %s32
      %p46 = scmp.eq.s32.totalorder %s24, 1
      %p47 = por %p45, %p46
      %p49 = scmp.ne.s32.totalorder %s32, %s48
      %p50 = scmp.eq.s32.totalorder %s24, 0
      %p51 = por %p49, %p50
      %s53 = sadd.s32 %s52, 1
      %p56 = scmp.eq.s32.totalorder %s18, 1
      %p57 = scmp.ne.s32.totalorder %s52, %s54
      %p58 = scmp.eq.s32.totalorder %s18, 0
      %p59 = por %p57, %p58
      %p60 = scmp.ne.s32.totalorder %s52, %s54
      %p61 = scmp.eq.s32.totalorder %s23, 1
      %p62 = por %p60, %p61
      %p63 = scmp.ne.s32.totalorder %s54, %s55
      %p64 = scmp.eq.s32.totalorder %s23, 0
      %p65 = por %p63, %p64
      %p66 = scmp.ne.s32.totalorder %s54, %s55
      %p67 = scmp.eq.s32.totalorder %s24, 1
      %p68 = por %p66, %p67
      %p70 = scmp.ne.s32.totalorder %s55, %s69
      %p71 = scmp.eq.s32.totalorder %s24, 0
      %p72 = por %p70, %p71
      %s74 = sadd.s32 %s73, 1
      %p77 = scmp.eq.s32.totalorder %s18, 1
      %p78 = scmp.ne.s32.totalorder %s73, %s75
      %p79 = scmp.eq.s32.totalorder %s18, 0
      %p80 = por %p78, %p79
      %p81 = scmp.ne.s32.totalorder %s73, %s75
      %p82 = scmp.eq.s32.totalorder %s23, 1
      %p83 = por %p81, %p82
      %p84 = scmp.ne.s32.totalorder %s75, %s76
      %p85 = scmp.eq.s32.totalorder %s23, 0
      %p86 = por %p84, %p85
      %p87 = scmp.ne.s32.totalorder %s75, %s76
      %p88 = scmp.eq.s32.totalorder %s24, 1
      %p89 = por %p87, %p88
      %p91 = scmp.ne.s32.totalorder %s76, %s90
      %p92 = scmp.eq.s32.totalorder %s24, 0
      %p93 = por %p91, %p92
      %s95 = sadd.s32 %s94, 1
      %p98 = scmp.eq.s32.totalorder %s18, 1
      %p99 = scmp.ne.s32.totalorder %s94, %s96
      %p100 = scmp.eq.s32.totalorder %s18, 0
      %p101 = por %p99, %p100
      %p102 = scmp.ne.s32.totalorder %s94, %s96
      %p103 = scmp.eq.s32.totalorder %s23, 1
      %p104 = por %p102, %p103
      %p105 = scmp.ne.s32.totalorder %s96, %s97
      %p106 = scmp.eq.s32.totalorder %s23, 0
      %p107 = por %p105, %p106
      %p108 = scmp.ne.s32.totalorder %s96, %s97
      %p109 = scmp.eq.s32.totalorder %s24, 1
      %p110 = por %p108, %p109
      %p112 = scmp.ne.s32.totalorder %s97, %s111
      %p113 = scmp.eq.s32.totalorder %s24, 0
      %p114 = por %p112, %p113
      %s116 = sadd.s32 %s115, 1
      %p119 = scmp.eq.s32.totalorder %s18, 1
      %p120 = scmp.ne.s32.totalorder %s115, %s117
      %p121 = scmp.eq.s32.totalorder %s18, 0
      %p122 = por %p120, %p121
      %p123 = scmp.ne.s32.totalorder %s115, %s117
      %p124 = scmp.eq.s32.totalorder %s23, 1
      %p125 = por %p123, %p124
      %p126 = scmp.ne.s32.totalorder %s117, %s118
      %p127 = scmp.eq.s32.totalorder %s23, 0
      %p128 = por %p126, %p127
      %p129 = scmp.ne.s32.totalorder %s117, %s118
      %p130 = scmp.eq.s32.totalorder %s24, 1
      %p131 = por %p129, %p130
      %p133 = scmp.ne.s32.totalorder %s118, %s132
      %p134 = scmp.eq.s32.totalorder %s24, 0
      %p135 = por %p133, %p134
      %s137 = sadd.s32 %s136, 1
      %p140 = scmp.eq.s32.totalorder %s18, 1
      %p141 = scmp.ne.s32.totalorder %s136, %s138
      %p142 = scmp.eq.s32.totalorder %s18, 0
      %p143 = por %p141, %p142
      %p144 = scmp.ne.s32.totalorder %s136, %s138
      %p145 = scmp.eq.s32.totalorder %s23, 1
      %p146 = por %p144, %p145
      %p147 = scmp.ne.s32.totalorder %s138, %s139
      %p148 = scmp.eq.s32.totalorder %s23, 0
      %p149 = por %p147, %p148
      %p150 = scmp.ne.s32.totalorder %s138, %s139
      %p151 = scmp.eq.s32.totalorder %s24, 1
      %p152 = por %p150, %p151
      %p154 = scmp.ne.s32.totalorder %s139, %s153
      %p155 = scmp.eq.s32.totalorder %s24, 0
      %p156 = por %p154, %p155
      %s158 = sadd.s32 %s157, 1
      %p161 = scmp.eq.s32.totalorder %s18, 1
      %p162 = scmp.ne.s32.totalorder %s157, %s159
      %p163 = scmp.eq.s32.totalorder %s18, 0
      %p164 = por %p162, %p163
      %p165 = scmp.ne.s32.totalorder %s157, %s159
      %p166 = scmp.eq.s32.totalorder %s23, 1
      %p167 = por %p165, %p166
      %p168 = scmp.ne.s32.totalorder %s159, %s160
      %p169 = scmp.eq.s32.totalorder %s23, 0
      %p170 = por %p168, %p169
      %p171 = scmp.ne.s32.totalorder %s159, %s160
      %p172 = scmp.eq.s32.totalorder %s24, 1
      %p173 = por %p171, %p172
      %p175 = scmp.ne.s32.totalorder %s160, %s174
      %p176 = scmp.eq.s32.totalorder %s24, 0
      %p177 = por %p175, %p176
      %s178 = ssub.s32 %s18, %s25
      %p179 = scmp.eq.s32.totalorder %s178, 0
      %s181 = sadd.s32 %s180, 1
      %s182 = scalar_select %p179, %s180, %s181
      %p185 = pneg %p179
      %p186 = scmp.eq.s32.totalorder %s18, 1
      %p187 = por %p185, %p186
      %p188 = scmp.ne.s32.totalorder %s180, %s183
      %p189 = scmp.eq.s32.totalorder %s18, 0
      %p190 = por %p188, %p189
      %p191 = scmp.ne.s32.totalorder %s180, %s183
      %p192 = scmp.eq.s32.totalorder %s23, 1
      %p193 = por %p191, %p192
      %p194 = scmp.ne.s32.totalorder %s183, %s184
      %p195 = scmp.eq.s32.totalorder %s23, 0
      %p196 = por %p194, %p195
      %p197 = scmp.ne.s32.totalorder %s183, %s184
      %p198 = scmp.eq.s32.totalorder %s24, 1
      %p199 = por %p197, %p198
      %p201 = scmp.ne.s32.totalorder %s184, %s200
      %p202 = scmp.eq.s32.totalorder %s24, 0
      %p203 = por %p201, %p202
      %p204 = scmp.le.s32.totalorder 1, %s18
      %p205 = scmp.lt.s32.totalorder %s18, 3
      %p206 = pnand %p204, %p205
      %p207 = pneg %p206
      // Predicated region
      $region9: #{makemore_rnn_forward.1} parent=5 // pred_check
        _
      $region10: #{makemore_rnn_forward.1} parent=5 // pred_check_branch
        %209 = sbr.rel (%p206) target = $region12
      $region11: #{makemore_rnn_forward.1} parent=5 // pred_region
        %s210 = ssub.s32 %s18, 1
        // Predicated region
        $region13: #{makemore_rnn_forward.1} parent=11 // pred_check
          %p211 = pneg %p65
        $region14: #{makemore_rnn_forward.1} parent=11 // pred_check_branch
          %213 = sbr.rel (%p211) target = $region16
        $region15: #{makemore_rnn_forward.1} parent=11 // pred_region
          %s215 = ssub.s32 512, 512
          %216 = vsyncadd [#allocation4], %s215
          %s217 = sshll.u32 [#allocation3], 4
          %s218 = int_to_ptr.vmem [resolvable:$true] %s217
          %223 = dma.hbm_to_vmem [thread:$0]  %s1, 512, %s218, [#allocation4], 128, 128, 8
        $region16: #{makemore_rnn_forward.1} parent=11 // pred_fallthru
          _
        // Predicated region
        $region17: #{makemore_rnn_forward.1} parent=11 // pred_check
          %p224 = pneg %p86
        $region18: #{makemore_rnn_forward.1} parent=11 // pred_check_branch
          %226 = sbr.rel (%p224) target = $region20
        $region19: #{makemore_rnn_forward.1} parent=11 // pred_region
          _
        $region20: #{makemore_rnn_forward.1} parent=11 // pred_fallthru
          _
        // Predicated region
        $region21: #{makemore_rnn_forward.1} parent=11 // pred_check
          %p227 = pneg %p107
        $region22: #{makemore_rnn_forward.1} parent=11 // pred_check_branch
          %229 = sbr.rel (%p227) target = $region24
        $region23: #{makemore_rnn_forward.1} parent=11 // pred_region
          %s231 = ssub.s32 1024, 1024
          %232 = vsyncadd [#allocation7], %s231
          %s233 = sshll.u32 [#allocation6], 4
          %s234 = int_to_ptr.vmem [resolvable:$true] %s233
          %239 = dma.hbm_to_vmem [thread:$0]  %s3, 1024, %s234, [#allocation7], 128, 128, 8
        $region24: #{makemore_rnn_forward.1} parent=11 // pred_fallthru
          _
        // Predicated region
        $region25: #{makemore_rnn_forward.1} parent=11 // pred_check
          %p240 = pneg %p128
        $region26: #{makemore_rnn_forward.1} parent=11 // pred_check_branch
          %242 = sbr.rel (%p240) target = $region28
        $region27: #{makemore_rnn_forward.1} parent=11 // pred_region
          _
        $region28: #{makemore_rnn_forward.1} parent=11 // pred_fallthru
          _
        // Predicated region
        $region29: #{makemore_rnn_forward.1} parent=11 // pred_check
          %p243 = pneg %p149
        $region30: #{makemore_rnn_forward.1} parent=11 // pred_check_branch
          %245 = sbr.rel (%p243) target = $region32
        $region31: #{makemore_rnn_forward.1} parent=11 // pred_region
          %s247 = ssub.s32 1024, 1024
          %248 = vsyncadd [#allocation7], %s247
          %s249 = sshll.u32 [#allocation8], 4
          %s250 = int_to_ptr.vmem [resolvable:$true] %s249
          %255 = dma.hbm_to_vmem [thread:$0]  %s5, 1024, %s250, [#allocation7], 128, 128, 8
        $region32: #{makemore_rnn_forward.1} parent=11 // pred_fallthru
          _
        // Predicated region
        $region33: #{makemore_rnn_forward.1} parent=11 // pred_check
          %p256 = pneg %p170
        $region34: #{makemore_rnn_forward.1} parent=11 // pred_check_branch
          %258 = sbr.rel (%p256) target = $region36
        $region35: #{makemore_rnn_forward.1} parent=11 // pred_region
          _
        $region36: #{makemore_rnn_forward.1} parent=11 // pred_fallthru
          _
      $region12: #{makemore_rnn_forward.1} parent=5 // pred_fallthru
        _
      %p259 = scmp.lt.s32.totalorder %s18, 2
      // Predicated region
      $region37: #{makemore_rnn_forward.1} parent=5 // pred_check
        %p260 = pneg %p259
      $region38: #{makemore_rnn_forward.1} parent=5 // pred_check_branch
        %262 = sbr.rel (%p260) target = $region40
      $region39: #{makemore_rnn_forward.1} parent=5 // pred_region
        // Predicated region
        $region41: #{makemore_rnn_forward.1} parent=39 // pred_check
          %p263 = pneg %p38
        $region42: #{makemore_rnn_forward.1} parent=39 // pred_check_branch
          %265 = sbr.rel (%p263) target = $region44
        $region43: #{makemore_rnn_forward.1} parent=39 // pred_region
          %p266 = scmp.lt.s32.totalorder %s18, 1
          %s267 = scalar_select %p266, %s18, 1
          %s268 = smul.addr %s267, 8
          %s269 = scalar_lea.vmem %s0, %s268
        $region44: #{makemore_rnn_forward.1} parent=39 // pred_fallthru
          _
      $region40: #{makemore_rnn_forward.1} parent=5 // pred_fallthru
        _
      %p270 = scmp.le.s32.totalorder 1, %s18
      %p271 = scmp.lt.s32.totalorder %s18, 3
      %p272 = pnand %p270, %p271
      %p273 = pneg %p272
      // Predicated region
      $region45: #{makemore_rnn_forward.1} parent=5 // pred_check
        _
      $region46: #{makemore_rnn_forward.1} parent=5 // pred_check_branch
        %275 = sbr.rel (%p272) target = $region48
      $region47: #{makemore_rnn_forward.1} parent=5 // pred_region
        %s276 = ssub.s32 %s18, 1
        // Predicated region
        $region49: #{makemore_rnn_forward.1} parent=47 // pred_check
          %p277 = pneg %p65
        $region50: #{makemore_rnn_forward.1} parent=47 // pred_check_branch
          %279 = sbr.rel (%p277) target = $region52
        $region51: #{makemore_rnn_forward.1} parent=47 // pred_region
          %280 = dma.done [#allocation4], 512
        $region52: #{makemore_rnn_forward.1} parent=47 // pred_fallthru
          _
        // Predicated region
        $region53: #{makemore_rnn_forward.1} parent=47 // pred_check
          %p281 = pneg %p107
        $region54: #{makemore_rnn_forward.1} parent=47 // pred_check_branch
          %283 = sbr.rel (%p281) target = $region56
        $region55: #{makemore_rnn_forward.1} parent=47 // pred_region
          %284 = dma.done [#allocation7], 1024
        $region56: #{makemore_rnn_forward.1} parent=47 // pred_fallthru
          _
        // Predicated region
        $region57: #{makemore_rnn_forward.1} parent=47 // pred_check
          %p285 = pneg %p149
        $region58: #{makemore_rnn_forward.1} parent=47 // pred_check_branch
          %287 = sbr.rel (%p285) target = $region60
        $region59: #{makemore_rnn_forward.1} parent=47 // pred_region
          %288 = dma.done [#allocation7], 1024
        $region60: #{makemore_rnn_forward.1} parent=47 // pred_fallthru
          _
        %p289 = scmp.lt.s32.totalorder %s23, 1
        %s290 = scalar_select %p289, %s23, 1
        %s291 = smul.addr %s290, 8
        %s292 = scalar_lea.vmem %s0, %s291
        %p293 = pneg %p44
        %p294 = pneg %p41
        %p295 = pneg %p65
        %p296 = pneg %p62
        %p297 = pneg %p86
        %p298 = pneg %p83
        %p299 = pneg %p107
        %p300 = pneg %p104
        %p301 = pneg %p128
        %p302 = pneg %p125
        %p303 = pneg %p149
        %p304 = pneg %p146
        %p305 = pneg %p170
        %p306 = pneg %p167
        %p307 = pneg %p196
        %p308 = pneg %p193
        %s309 = sand.u32 %s183, 1
        %s310 = scalar_lea.sflag [#allocation5], %s309
        %s311 = sand.u32 %s183, 1
        %s312 = smul.addr %s311, 8
        %s313 = scalar_lea.vmem [#allocation9], %s312
        %p314 = scmp.lt.s32.totalorder %s23, 1
        %s315 = scalar_select %p314, %s23, 1
        %s316 = smul.addr %s315, 8
        %s317 = scalar_lea.vmem %s0, %s316
        %v318 = vld [vmem:[%s317] sm:$0xff]
        %v319 = vlaneseq
        %v320 = vand.u32 %v319, 127
        %321 = vset.pattern.permute.xlu0 0
        %322 = vperm.xlu0 %321, %v318
        %v323 = vpop.permute.xlu0 %322
        %vm324 = vcmp.eq.s32.totalorder %v323, %v320
        %v325 = vsel %vm324, 1, 0
        %v326 = vcvt.s32.f32 %v325
        %v327 = vld [vmem:[#allocation3] sm:$0xff]
        %v328 = vld [vmem:[#allocation3 + $0x8] sm:$0xff]
        %v329 = vld [vmem:[#allocation3 + $0x10] sm:$0xff]
        %v330 = vld [vmem:[#allocation3 + $0x18] sm:$0x7]
        %v331 = vld [vmem:[%s4] sm:$0x1]
        %v333 = vlaneseq
        %v334 = vshrl.u32 %v333, 7
        %v335 = vsub.s32 0, %v334
        %v336 = vrot.slane %v331, %v335
        %vm338 = vcmask 220160
        %v340 = vsel %vm338, %v326, 0
        %vm342 = vcmask 1042432
        %v344 = vsel %vm342, %v330, 0
        %346 = vmatprep.subr.mxu0 0.0
        %347 = vmatpush1.msra.mxu0 %v327
        %348 = vmatprep.subr.mxu0 0.0
        %349 = vmatpush1.msra.mxu0 %v328
        %350 = vmatprep.subr.mxu0 0.0
        %351 = vmatpush1.msra.mxu0 %v329
        %352 = vmatprep.subr.mxu0 0.0
        %353 = vmatpush1.msra.mxu0 %v344
        %354 = vmatprep.subr.mxu0 0.0
        %355 = vmatpush1.msra.mxu0 0.0
        %356 = vmatprep.subr.mxu0 0.0
        %357 = vmatpush1.msra.mxu0 0.0
        %358 = vmatprep.subr.mxu0 0.0
        %359 = vmatpush1.msra.mxu0 0.0
        %360 = vmatprep.subr.mxu0 0.0
        %361 = vmatpush1.msra.mxu0 0.0
        %362 = vmatprep.subr.mxu0 0.0
        %363 = vmatpush1.msra.mxu0 0.0
        %364 = vmatprep.subr.mxu0 0.0
        %365 = vmatpush1.msra.mxu0 0.0
        %366 = vmatprep.subr.mxu0 0.0
        %367 = vmatpush1.msra.mxu0 0.0
        %368 = vmatprep.subr.mxu0 0.0
        %369 = vmatpush1.msra.mxu0 0.0
        %370 = vmatprep.subr.mxu0 0.0
        %371 = vmatpush1.msra.mxu0 0.0
        %372 = vmatprep.subr.mxu0 0.0
        %373 = vmatpush1.msra.mxu0 0.0
        %374 = vmatprep.subr.mxu0 0.0
        %375 = vmatpush1.msra.mxu0 0.0
        %376 = vmatprep.subr.mxu0 0.0
        %377 = vmatpush1.msra.mxu0 0.0
        %378 = vmatprep.subr.mxu0 0.0
        %379 = vmatpush1.msra.mxu0 0.0
        %380 = vmatprep.subr.mxu0 0.0
        %381 = vmatpush1.msra.mxu0 0.0
        %382 = vmatprep.subr.mxu0 0.0
        %383 = vmatpush1.msra.mxu0 0.0
        %384 = vmatprep.subr.mxu0 0.0
        %385 = vmatpush1.msra.mxu0 0.0
        %386 = vmatprep.subr.mxu0 0.0
        %387 = vmatpush1.msra.mxu0 0.0
        %388 = vmatprep.subr.mxu0 0.0
        %389 = vmatpush1.msra.mxu0 0.0
        %390 = vmatprep.subr.mxu0 0.0
        %391 = vmatpush1.msra.mxu0 0.0
        %392 = vmatprep.subr.mxu0 0.0
        %393 = vmatpush1.msra.mxu0 0.0
        %394 = vmatprep.subr.mxu0 0.0
        %395 = vmatpush1.msra.mxu0 0.0
        %396 = vmatprep.subr.mxu0 0.0
        %397 = vmatpush1.msra.mxu0 0.0
        %398 = vmatprep.subr.mxu0 0.0
        %399 = vmatpush1.msra.mxu0 0.0
        %400 = vmatprep.subr.mxu0 0.0
        %401 = vmatpush1.msra.mxu0 0.0
        %402 = vmatprep.subr.mxu0 0.0
        %403 = vmatpush1.msra.mxu0 0.0
        %404 = vmatprep.subr.mxu0 0.0
        %405 = vmatpush1.msra.mxu0 0.0
        %406 = vmatprep.subr.mxu0 0.0
        %407 = vmatpush1.msra.mxu0 0.0
        %408 = vmatprep.subr.mxu0 0.0
        %409 = vmatpush1.msra.mxu0 0.0
        %410 = vmatprep.mubr.f32.mxu0 0.0
        %411 = vmatmul.mubr.f32.gmra.mrb[0].mxu0 %v340
        %v412 = vpop.f32.mrb[0].mxu0
        %v413 = vadd.f32 %v336, %v412
        %v414 = vpop.f32.mrb[0].mxu0
        %415 = vdwg.mxu0
        %v416 = vld [vmem:[%s2] sm:$0x1]
        %v417 = vld [vmem:[#allocation6] sm:$0xff]
        %v418 = vld [vmem:[#allocation6 + $0x8] sm:$0xff]
        %v419 = vld [vmem:[#allocation6 + $0x10] sm:$0xff]
        %v420 = vld [vmem:[#allocation6 + $0x18] sm:$0xff]
        %v421 = vld [vmem:[#allocation6 + $0x20] sm:$0xff]
        %v422 = vld [vmem:[#allocation6 + $0x28] sm:$0xff]
        %v423 = vld [vmem:[#allocation6 + $0x30] sm:$0xff]
        %v424 = vld [vmem:[#allocation6 + $0x38] sm:$0xff]
        %vm425 = vcmask 523264
        %v427 = vsel %vm425, %v416, 0
        %429 = vmatprep.subr.mxu0 0.0
        %430 = vmatpush1.msra.mxu0 %v417
        %431 = vmatprep.subr.mxu0 0.0
        %432 = vmatpush1.msra.mxu0 %v418
        %433 = vmatprep.subr.mxu0 0.0
        %434 = vmatpush1.msra.mxu0 %v419
        %435 = vmatprep.subr.mxu0 0.0
        %436 = vmatpush1.msra.mxu0 %v420
        %437 = vmatprep.subr.mxu0 0.0
        %438 = vmatpush1.msra.mxu0 %v421
        %439 = vmatprep.subr.mxu0 0.0
        %440 = vmatpush1.msra.mxu0 %v422
        %441 = vmatprep.subr.mxu0 0.0
        %442 = vmatpush1.msra.mxu0 %v423
        %443 = vmatprep.subr.mxu0 0.0
        %444 = vmatpush1.msra.mxu0 %v424
        %445 = vmatprep.subr.mxu0 0.0
        %446 = vmatpush1.msra.mxu0 0.0
        %447 = vmatprep.subr.mxu0 0.0
        %448 = vmatpush1.msra.mxu0 0.0
        %449 = vmatprep.subr.mxu0 0.0
        %450 = vmatpush1.msra.mxu0 0.0
        %451 = vmatprep.subr.mxu0 0.0
        %452 = vmatpush1.msra.mxu0 0.0
        %453 = vmatprep.subr.mxu0 0.0
        %454 = vmatpush1.msra.mxu0 0.0
        %455 = vmatprep.subr.mxu0 0.0
        %456 = vmatpush1.msra.mxu0 0.0
        %457 = vmatprep.subr.mxu0 0.0
        %458 = vmatpush1.msra.mxu0 0.0
        %459 = vmatprep.subr.mxu0 0.0
        %460 = vmatpush1.msra.mxu0 0.0
        %461 = vmatprep.subr.mxu0 0.0
        %462 = vmatpush1.msra.mxu0 0.0
        %463 = vmatprep.subr.mxu0 0.0
        %464 = vmatpush1.msra.mxu0 0.0
        %465 = vmatprep.subr.mxu0 0.0
        %466 = vmatpush1.msra.mxu0 0.0
        %467 = vmatprep.subr.mxu0 0.0
        %468 = vmatpush1.msra.mxu0 0.0
        %469 = vmatprep.subr.mxu0 0.0
        %470 = vmatpush1.msra.mxu0 0.0
        %471 = vmatprep.subr.mxu0 0.0
        %472 = vmatpush1.msra.mxu0 0.0
        %473 = vmatprep.subr.mxu0 0.0
        %474 = vmatpush1.msra.mxu0 0.0
        %475 = vmatprep.subr.mxu0 0.0
        %476 = vmatpush1.msra.mxu0 0.0
        %477 = vmatprep.subr.mxu0 0.0
        %478 = vmatpush1.msra.mxu0 0.0
        %479 = vmatprep.subr.mxu0 0.0
        %480 = vmatpush1.msra.mxu0 0.0
        %481 = vmatprep.subr.mxu0 0.0
        %482 = vmatpush1.msra.mxu0 0.0
        %483 = vmatprep.subr.mxu0 0.0
        %484 = vmatpush1.msra.mxu0 0.0
        %485 = vmatprep.subr.mxu0 0.0
        %486 = vmatpush1.msra.mxu0 0.0
        %487 = vmatprep.subr.mxu0 0.0
        %488 = vmatpush1.msra.mxu0 0.0
        %489 = vmatprep.subr.mxu0 0.0
        %490 = vmatpush1.msra.mxu0 0.0
        %491 = vmatprep.subr.mxu0 0.0
        %492 = vmatpush1.msra.mxu0 0.0
        %493 = vmatprep.mubr.f32.mxu0 0.0
        %494 = vmatmul.mubr.f32.gmra.mrb[0].mxu0 %v427
        %v495 = vpop.f32.mrb[0].mxu0
        %v496 = vadd.f32 0.0, %v495
        %v497 = vpop.f32.mrb[0].mxu0
        %498 = vdwg.mxu0
        %v499 = vadd.f32 %v413, %v496
        %v500 = vtanh.pop %v499
        %vm501 = vcmask 516096
        %502 = vst.msk [vmem:[#allocation2] sm:$0x1] %vm501, %v500
        %v503 = vld [vmem:[#allocation6] sm:$0xff]
        %v504 = vld [vmem:[#allocation6 + $0x8] sm:$0xff]
        %v505 = vld [vmem:[#allocation6 + $0x10] sm:$0xff]
        %v506 = vld [vmem:[#allocation6 + $0x18] sm:$0xff]
        %v507 = vld [vmem:[#allocation6 + $0x20] sm:$0xff]
        %v508 = vld [vmem:[#allocation6 + $0x28] sm:$0xff]
        %v509 = vld [vmem:[#allocation6 + $0x30] sm:$0xff]
        %v510 = vld [vmem:[#allocation6 + $0x38] sm:$0xff]
        %v512 = vsel %vm425, %v500, 0
        %514 = vmatprep.subr.mxu0 0.0
        %515 = vmatpush1.msra.mxu0 %v503
        %516 = vmatprep.subr.mxu0 0.0
        %517 = vmatpush1.msra.mxu0 %v504
        %518 = vmatprep.subr.mxu0 0.0
        %519 = vmatpush1.msra.mxu0 %v505
        %520 = vmatprep.subr.mxu0 0.0
        %521 = vmatpush1.msra.mxu0 %v506
        %522 = vmatprep.subr.mxu0 0.0
        %523 = vmatpush1.msra.mxu0 %v507
        %524 = vmatprep.subr.mxu0 0.0
        %525 = vmatpush1.msra.mxu0 %v508
        %526 = vmatprep.subr.mxu0 0.0
        %527 = vmatpush1.msra.mxu0 %v509
        %528 = vmatprep.subr.mxu0 0.0
        %529 = vmatpush1.msra.mxu0 %v510
        %530 = vmatprep.subr.mxu0 0.0
        %531 = vmatpush1.msra.mxu0 0.0
        %532 = vmatprep.subr.mxu0 0.0
        %533 = vmatpush1.msra.mxu0 0.0
        %534 = vmatprep.subr.mxu0 0.0
        %535 = vmatpush1.msra.mxu0 0.0
        %536 = vmatprep.subr.mxu0 0.0
        %537 = vmatpush1.msra.mxu0 0.0
        %538 = vmatprep.subr.mxu0 0.0
        %539 = vmatpush1.msra.mxu0 0.0
        %540 = vmatprep.subr.mxu0 0.0
        %541 = vmatpush1.msra.mxu0 0.0
        %542 = vmatprep.subr.mxu0 0.0
        %543 = vmatpush1.msra.mxu0 0.0
        %544 = vmatprep.subr.mxu0 0.0
        %545 = vmatpush1.msra.mxu0 0.0
        %546 = vmatprep.subr.mxu0 0.0
        %547 = vmatpush1.msra.mxu0 0.0
        %548 = vmatprep.subr.mxu0 0.0
        %549 = vmatpush1.msra.mxu0 0.0
        %550 = vmatprep.subr.mxu0 0.0
        %551 = vmatpush1.msra.mxu0 0.0
        %552 = vmatprep.subr.mxu0 0.0
        %553 = vmatpush1.msra.mxu0 0.0
        %554 = vmatprep.subr.mxu0 0.0
        %555 = vmatpush1.msra.mxu0 0.0
        %556 = vmatprep.subr.mxu0 0.0
        %557 = vmatpush1.msra.mxu0 0.0
        %558 = vmatprep.subr.mxu0 0.0
        %559 = vmatpush1.msra.mxu0 0.0
        %560 = vmatprep.subr.mxu0 0.0
        %561 = vmatpush1.msra.mxu0 0.0
        %562 = vmatprep.subr.mxu0 0.0
        %563 = vmatpush1.msra.mxu0 0.0
        %564 = vmatprep.subr.mxu0 0.0
        %565 = vmatpush1.msra.mxu0 0.0
        %566 = vmatprep.subr.mxu0 0.0
        %567 = vmatpush1.msra.mxu0 0.0
        %568 = vmatprep.subr.mxu0 0.0
        %569 = vmatpush1.msra.mxu0 0.0
        %570 = vmatprep.subr.mxu0 0.0
        %571 = vmatpush1.msra.mxu0 0.0
        %572 = vmatprep.subr.mxu0 0.0
        %573 = vmatpush1.msra.mxu0 0.0
        %574 = vmatprep.subr.mxu0 0.0
        %575 = vmatpush1.msra.mxu0 0.0
        %576 = vmatprep.subr.mxu0 0.0
        %577 = vmatpush1.msra.mxu0 0.0
        %578 = vmatprep.mubr.f32.mxu0 0.0
        %579 = vmatmul.mubr.f32.gmra.mrb[0].mxu0 %v512
        %v580 = vpop.f32.mrb[0].mxu0
        %v581 = vadd.f32 0.0, %v580
        %v582 = vpop.f32.mrb[0].mxu0
        %583 = vdwg.mxu0
        %v585 = vrot.slane %v581, 7
        %v587 = vadd.f32 %v413, %v585
        %v588 = vtanh.pop %v587
        %vm589 = vcmask 517121
        %590 = vst.msk [vmem:[#allocation2] sm:$0x2] %vm589, %v588
        %v591 = vld [vmem:[#allocation6] sm:$0xff]
        %v592 = vld [vmem:[#allocation6 + $0x8] sm:$0xff]
        %v593 = vld [vmem:[#allocation6 + $0x10] sm:$0xff]
        %v594 = vld [vmem:[#allocation6 + $0x18] sm:$0xff]
        %v595 = vld [vmem:[#allocation6 + $0x20] sm:$0xff]
        %v596 = vld [vmem:[#allocation6 + $0x28] sm:$0xff]
        %v597 = vld [vmem:[#allocation6 + $0x30] sm:$0xff]
        %v598 = vld [vmem:[#allocation6 + $0x38] sm:$0xff]
        %v600 = vrot.slane %v588, 1
        %v601 = vsel %vm425, %v600, 0
        %603 = vmatprep.subr.mxu0 0.0
        %604 = vmatpush1.msra.mxu0 %v591
        %605 = vmatprep.subr.mxu0 0.0
        %606 = vmatpush1.msra.mxu0 %v592
        %607 = vmatprep.subr.mxu0 0.0
        %608 = vmatpush1.msra.mxu0 %v593
        %609 = vmatprep.subr.mxu0 0.0
        %610 = vmatpush1.msra.mxu0 %v594
        %611 = vmatprep.subr.mxu0 0.0
        %612 = vmatpush1.msra.mxu0 %v595
        %613 = vmatprep.subr.mxu0 0.0
        %614 = vmatpush1.msra.mxu0 %v596
        %615 = vmatprep.subr.mxu0 0.0
        %616 = vmatpush1.msra.mxu0 %v597
        %617 = vmatprep.subr.mxu0 0.0
        %618 = vmatpush1.msra.mxu0 %v598
        %619 = vmatprep.subr.mxu0 0.0
        %620 = vmatpush1.msra.mxu0 0.0
        %621 = vmatprep.subr.mxu0 0.0
        %622 = vmatpush1.msra.mxu0 0.0
        %623 = vmatprep.subr.mxu0 0.0
        %624 = vmatpush1.msra.mxu0 0.0
        %625 = vmatprep.subr.mxu0 0.0
        %626 = vmatpush1.msra.mxu0 0.0
        %627 = vmatprep.subr.mxu0 0.0
        %628 = vmatpush1.msra.mxu0 0.0
        %629 = vmatprep.subr.mxu0 0.0
        %630 = vmatpush1.msra.mxu0 0.0
        %631 = vmatprep.subr.mxu0 0.0
        %632 = vmatpush1.msra.mxu0 0.0
        %633 = vmatprep.subr.mxu0 0.0
        %634 = vmatpush1.msra.mxu0 0.0
        %635 = vmatprep.subr.mxu0 0.0
        %636 = vmatpush1.msra.mxu0 0.0
        %637 = vmatprep.subr.mxu0 0.0
        %638 = vmatpush1.msra.mxu0 0.0
        %639 = vmatprep.subr.mxu0 0.0
        %640 = vmatpush1.msra.mxu0 0.0
        %641 = vmatprep.subr.mxu0 0.0
        %642 = vmatpush1.msra.mxu0 0.0
        %643 = vmatprep.subr.mxu0 0.0
        %644 = vmatpush1.msra.mxu0 0.0
        %645 = vmatprep.subr.mxu0 0.0
        %646 = vmatpush1.msra.mxu0 0.0
        %647 = vmatprep.subr.mxu0 0.0
        %648 = vmatpush1.msra.mxu0 0.0
        %649 = vmatprep.subr.mxu0 0.0
        %650 = vmatpush1.msra.mxu0 0.0
        %651 = vmatprep.subr.mxu0 0.0
        %652 = vmatpush1.msra.mxu0 0.0
        %653 = vmatprep.subr.mxu0 0.0
        %654 = vmatpush1.msra.mxu0 0.0
        %655 = vmatprep.subr.mxu0 0.0
        %656 = vmatpush1.msra.mxu0 0.0
        %657 = vmatprep.subr.mxu0 0.0
        %658 = vmatpush1.msra.mxu0 0.0
        %659 = vmatprep.subr.mxu0 0.0
        %660 = vmatpush1.msra.mxu0 0.0
        %661 = vmatprep.subr.mxu0 0.0
        %662 = vmatpush1.msra.mxu0 0.0
        %663 = vmatprep.subr.mxu0 0.0
        %664 = vmatpush1.msra.mxu0 0.0
        %665 = vmatprep.subr.mxu0 0.0
        %666 = vmatpush1.msra.mxu0 0.0
        %667 = vmatprep.mubr.f32.mxu0 0.0
        %668 = vmatmul.mubr.f32.gmra.mrb[0].mxu0 %v601
        %v669 = vpop.f32.mrb[0].mxu0
        %v670 = vadd.f32 0.0, %v669
        %v671 = vpop.f32.mrb[0].mxu0
        %672 = vdwg.mxu0
        %v674 = vrot.slane %v670, 6
        %v676 = vadd.f32 %v413, %v674
        %v677 = vtanh.pop %v676
        %vm678 = vcmask 518146
        %679 = vst.msk [vmem:[#allocation2] sm:$0x4] %vm678, %v677
        %v680 = vld [vmem:[#allocation6] sm:$0xff]
        %v681 = vld [vmem:[#allocation6 + $0x8] sm:$0xff]
        %v682 = vld [vmem:[#allocation6 + $0x10] sm:$0xff]
        %v683 = vld [vmem:[#allocation6 + $0x18] sm:$0xff]
        %v684 = vld [vmem:[#allocation6 + $0x20] sm:$0xff]
        %v685 = vld [vmem:[#allocation6 + $0x28] sm:$0xff]
        %v686 = vld [vmem:[#allocation6 + $0x30] sm:$0xff]
        %v687 = vld [vmem:[#allocation6 + $0x38] sm:$0xff]
        %v689 = vrot.slane %v677, 2
        %v690 = vsel %vm425, %v689, 0
        %692 = vmatprep.subr.mxu0 0.0
        %693 = vmatpush1.msra.mxu0 %v680
        %694 = vmatprep.subr.mxu0 0.0
        %695 = vmatpush1.msra.mxu0 %v681
        %696 = vmatprep.subr.mxu0 0.0
        %697 = vmatpush1.msra.mxu0 %v682
        %698 = vmatprep.subr.mxu0 0.0
        %699 = vmatpush1.msra.mxu0 %v683
        %700 = vmatprep.subr.mxu0 0.0
        %701 = vmatpush1.msra.mxu0 %v684
        %702 = vmatprep.subr.mxu0 0.0
        %703 = vmatpush1.msra.mxu0 %v685
        %704 = vmatprep.subr.mxu0 0.0
        %705 = vmatpush1.msra.mxu0 %v686
        %706 = vmatprep.subr.mxu0 0.0
        %707 = vmatpush1.msra.mxu0 %v687
        %708 = vmatprep.subr.mxu0 0.0
        %709 = vmatpush1.msra.mxu0 0.0
        %710 = vmatprep.subr.mxu0 0.0
        %711 = vmatpush1.msra.mxu0 0.0
        %712 = vmatprep.subr.mxu0 0.0
        %713 = vmatpush1.msra.mxu0 0.0
        %714 = vmatprep.subr.mxu0 0.0
        %715 = vmatpush1.msra.mxu0 0.0
        %716 = vmatprep.subr.mxu0 0.0
        %717 = vmatpush1.msra.mxu0 0.0
        %718 = vmatprep.subr.mxu0 0.0
        %719 = vmatpush1.msra.mxu0 0.0
        %720 = vmatprep.subr.mxu0 0.0
        %721 = vmatpush1.msra.mxu0 0.0
        %722 = vmatprep.subr.mxu0 0.0
        %723 = vmatpush1.msra.mxu0 0.0
        %724 = vmatprep.subr.mxu0 0.0
        %725 = vmatpush1.msra.mxu0 0.0
        %726 = vmatprep.subr.mxu0 0.0
        %727 = vmatpush1.msra.mxu0 0.0
        %728 = vmatprep.subr.mxu0 0.0
        %729 = vmatpush1.msra.mxu0 0.0
        %730 = vmatprep.subr.mxu0 0.0
        %731 = vmatpush1.msra.mxu0 0.0
        %732 = vmatprep.subr.mxu0 0.0
        %733 = vmatpush1.msra.mxu0 0.0
        %734 = vmatprep.subr.mxu0 0.0
        %735 = vmatpush1.msra.mxu0 0.0
        %736 = vmatprep.subr.mxu0 0.0
        %737 = vmatpush1.msra.mxu0 0.0
        %738 = vmatprep.subr.mxu0 0.0
        %739 = vmatpush1.msra.mxu0 0.0
        %740 = vmatprep.subr.mxu0 0.0
        %741 = vmatpush1.msra.mxu0 0.0
        %742 = vmatprep.subr.mxu0 0.0
        %743 = vmatpush1.msra.mxu0 0.0
        %744 = vmatprep.subr.mxu0 0.0
        %745 = vmatpush1.msra.mxu0 0.0
        %746 = vmatprep.subr.mxu0 0.0
        %747 = vmatpush1.msra.mxu0 0.0
        %748 = vmatprep.subr.mxu0 0.0
        %749 = vmatpush1.msra.mxu0 0.0
        %750 = vmatprep.subr.mxu0 0.0
        %751 = vmatpush1.msra.mxu0 0.0
        %752 = vmatprep.subr.mxu0 0.0
        %753 = vmatpush1.msra.mxu0 0.0
        %754 = vmatprep.subr.mxu0 0.0
        %755 = vmatpush1.msra.mxu0 0.0
        %756 = vmatprep.mubr.f32.mxu0 0.0
        %757 = vmatmul.mubr.f32.gmra.mrb[0].mxu0 %v690
        %v758 = vpop.f32.mrb[0].mxu0
        %v759 = vadd.f32 0.0, %v758
        %v760 = vpop.f32.mrb[0].mxu0
        %761 = vdwg.mxu0
        %v763 = vrot.slane %v759, 5
        %v765 = vadd.f32 %v413, %v763
        %v766 = vtanh.pop %v765
        %vm767 = vcmask 519171
        %768 = vst.msk [vmem:[#allocation2] sm:$0x8] %vm767, %v766
        %v769 = vld [vmem:[#allocation6] sm:$0xff]
        %v770 = vld [vmem:[#allocation6 + $0x8] sm:$0xff]
        %v771 = vld [vmem:[#allocation6 + $0x10] sm:$0xff]
        %v772 = vld [vmem:[#allocation6 + $0x18] sm:$0xff]
        %v773 = vld [vmem:[#allocation6 + $0x20] sm:$0xff]
        %v774 = vld [vmem:[#allocation6 + $0x28] sm:$0xff]
        %v775 = vld [vmem:[#allocation6 + $0x30] sm:$0xff]
        %v776 = vld [vmem:[#allocation6 + $0x38] sm:$0xff]
        %v778 = vrot.slane %v766, 3
        %v779 = vsel %vm425, %v778, 0
        %781 = vmatprep.subr.mxu0 0.0
        %782 = vmatpush1.msra.mxu0 %v769
        %783 = vmatprep.subr.mxu0 0.0
        %784 = vmatpush1.msra.mxu0 %v770
        %785 = vmatprep.subr.mxu0 0.0
        %786 = vmatpush1.msra.mxu0 %v771
        %787 = vmatprep.subr.mxu0 0.0
        %788 = vmatpush1.msra.mxu0 %v772
        %789 = vmatprep.subr.mxu0 0.0
        %790 = vmatpush1.msra.mxu0 %v773
        %791 = vmatprep.subr.mxu0 0.0
        %792 = vmatpush1.msra.mxu0 %v774
        %793 = vmatprep.subr.mxu0 0.0
        %794 = vmatpush1.msra.mxu0 %v775
        %795 = vmatprep.subr.mxu0 0.0
        %796 = vmatpush1.msra.mxu0 %v776
        %797 = vmatprep.subr.mxu0 0.0
        %798 = vmatpush1.msra.mxu0 0.0
        %799 = vmatprep.subr.mxu0 0.0
        %800 = vmatpush1.msra.mxu0 0.0
        %801 = vmatprep.subr.mxu0 0.0
        %802 = vmatpush1.msra.mxu0 0.0
        %803 = vmatprep.subr.mxu0 0.0
        %804 = vmatpush1.msra.mxu0 0.0
        %805 = vmatprep.subr.mxu0 0.0
        %806 = vmatpush1.msra.mxu0 0.0
        %807 = vmatprep.subr.mxu0 0.0
        %808 = vmatpush1.msra.mxu0 0.0
        %809 = vmatprep.subr.mxu0 0.0
        %810 = vmatpush1.msra.mxu0 0.0
        %811 = vmatprep.subr.mxu0 0.0
        %812 = vmatpush1.msra.mxu0 0.0
        %813 = vmatprep.subr.mxu0 0.0
        %814 = vmatpush1.msra.mxu0 0.0
        %815 = vmatprep.subr.mxu0 0.0
        %816 = vmatpush1.msra.mxu0 0.0
        %817 = vmatprep.subr.mxu0 0.0
        %818 = vmatpush1.msra.mxu0 0.0
        %819 = vmatprep.subr.mxu0 0.0
        %820 = vmatpush1.msra.mxu0 0.0
        %821 = vmatprep.subr.mxu0 0.0
        %822 = vmatpush1.msra.mxu0 0.0
        %823 = vmatprep.subr.mxu0 0.0
        %824 = vmatpush1.msra.mxu0 0.0
        %825 = vmatprep.subr.mxu0 0.0
        %826 = vmatpush1.msra.mxu0 0.0
        %827 = vmatprep.subr.mxu0 0.0
        %828 = vmatpush1.msra.mxu0 0.0
        %829 = vmatprep.subr.mxu0 0.0
        %830 = vmatpush1.msra.mxu0 0.0
        %831 = vmatprep.subr.mxu0 0.0
        %832 = vmatpush1.msra.mxu0 0.0
        %833 = vmatprep.subr.mxu0 0.0
        %834 = vmatpush1.msra.mxu0 0.0
        %835 = vmatprep.subr.mxu0 0.0
        %836 = vmatpush1.msra.mxu0 0.0
        %837 = vmatprep.subr.mxu0 0.0
        %838 = vmatpush1.msra.mxu0 0.0
        %839 = vmatprep.subr.mxu0 0.0
        %840 = vmatpush1.msra.mxu0 0.0
        %841 = vmatprep.subr.mxu0 0.0
        %842 = vmatpush1.msra.mxu0 0.0
        %843 = vmatprep.subr.mxu0 0.0
        %844 = vmatpush1.msra.mxu0 0.0
        %845 = vmatprep.mubr.f32.mxu0 0.0
        %846 = vmatmul.mubr.f32.gmra.mrb[0].mxu0 %v779
        %v847 = vpop.f32.mrb[0].mxu0
        %v848 = vadd.f32 0.0, %v847
        %v849 = vpop.f32.mrb[0].mxu0
        %850 = vdwg.mxu0
        %v852 = vrot.slane %v848, 4
        %v854 = vadd.f32 %v413, %v852
        %v855 = vtanh.pop %v854
        %vm856 = vcmask 520196
        %857 = vst.msk [vmem:[#allocation2] sm:$0x10] %vm856, %v855
        %v858 = vld [vmem:[#allocation6] sm:$0xff]
        %v859 = vld [vmem:[#allocation6 + $0x8] sm:$0xff]
        %v860 = vld [vmem:[#allocation6 + $0x10] sm:$0xff]
        %v861 = vld [vmem:[#allocation6 + $0x18] sm:$0xff]
        %v862 = vld [vmem:[#allocation6 + $0x20] sm:$0xff]
        %v863 = vld [vmem:[#allocation6 + $0x28] sm:$0xff]
        %v864 = vld [vmem:[#allocation6 + $0x30] sm:$0xff]
        %v865 = vld [vmem:[#allocation6 + $0x38] sm:$0xff]
        %v867 = vrot.slane %v855, 4
        %v868 = vsel %vm425, %v867, 0
        %870 = vmatprep.subr.mxu0 0.0
        %871 = vmatpush1.msra.mxu0 %v858
        %872 = vmatprep.subr.mxu0 0.0
        %873 = vmatpush1.msra.mxu0 %v859
        %874 = vmatprep.subr.mxu0 0.0
        %875 = vmatpush1.msra.mxu0 %v860
        %876 = vmatprep.subr.mxu0 0.0
        %877 = vmatpush1.msra.mxu0 %v861
        %878 = vmatprep.subr.mxu0 0.0
        %879 = vmatpush1.msra.mxu0 %v862
        %880 = vmatprep.subr.mxu0 0.0
        %881 = vmatpush1.msra.mxu0 %v863
        %882 = vmatprep.subr.mxu0 0.0
        %883 = vmatpush1.msra.mxu0 %v864
        %884 = vmatprep.subr.mxu0 0.0
        %885 = vmatpush1.msra.mxu0 %v865
        %886 = vmatprep.subr.mxu0 0.0
        %887 = vmatpush1.msra.mxu0 0.0
        %888 = vmatprep.subr.mxu0 0.0
        %889 = vmatpush1.msra.mxu0 0.0
        %890 = vmatprep.subr.mxu0 0.0
        %891 = vmatpush1.msra.mxu0 0.0
        %892 = vmatprep.subr.mxu0 0.0
        %893 = vmatpush1.msra.mxu0 0.0
        %894 = vmatprep.subr.mxu0 0.0
        %895 = vmatpush1.msra.mxu0 0.0
        %896 = vmatprep.subr.mxu0 0.0
        %897 = vmatpush1.msra.mxu0 0.0
        %898 = vmatprep.subr.mxu0 0.0
        %899 = vmatpush1.msra.mxu0 0.0
        %900 = vmatprep.subr.mxu0 0.0
        %901 = vmatpush1.msra.mxu0 0.0
        %902 = vmatprep.subr.mxu0 0.0
        %903 = vmatpush1.msra.mxu0 0.0
        %904 = vmatprep.subr.mxu0 0.0
        %905 = vmatpush1.msra.mxu0 0.0
        %906 = vmatprep.subr.mxu0 0.0
        %907 = vmatpush1.msra.mxu0 0.0
        %908 = vmatprep.subr.mxu0 0.0
        %909 = vmatpush1.msra.mxu0 0.0
        %910 = vmatprep.subr.mxu0 0.0
        %911 = vmatpush1.msra.mxu0 0.0
        %912 = vmatprep.subr.mxu0 0.0
        %913 = vmatpush1.msra.mxu0 0.0
        %914 = vmatprep.subr.mxu0 0.0
        %915 = vmatpush1.msra.mxu0 0.0
        %916 = vmatprep.subr.mxu0 0.0
        %917 = vmatpush1.msra.mxu0 0.0
        %918 = vmatprep.subr.mxu0 0.0
        %919 = vmatpush1.msra.mxu0 0.0
        %920 = vmatprep.subr.mxu0 0.0
        %921 = vmatpush1.msra.mxu0 0.0
        %922 = vmatprep.subr.mxu0 0.0
        %923 = vmatpush1.msra.mxu0 0.0
        %924 = vmatprep.subr.mxu0 0.0
        %925 = vmatpush1.msra.mxu0 0.0
        %926 = vmatprep.subr.mxu0 0.0
        %927 = vmatpush1.msra.mxu0 0.0
        %928 = vmatprep.subr.mxu0 0.0
        %929 = vmatpush1.msra.mxu0 0.0
        %930 = vmatprep.subr.mxu0 0.0
        %931 = vmatpush1.msra.mxu0 0.0
        %932 = vmatprep.subr.mxu0 0.0
        %933 = vmatpush1.msra.mxu0 0.0
        %934 = vmatprep.mubr.f32.mxu0 0.0
        %935 = vmatmul.mubr.f32.gmra.mrb[0].mxu0 %v868
        %v936 = vpop.f32.mrb[0].mxu0
        %v937 = vadd.f32 0.0, %v936
        %v938 = vpop.f32.mrb[0].mxu0
        %939 = vdwg.mxu0
        %v941 = vrot.slane %v937, 3
        %v943 = vadd.f32 %v413, %v941
        %v944 = vtanh.pop %v943
        %vm945 = vcmask 521221
        %946 = vst.msk [vmem:[#allocation2] sm:$0x20] %vm945, %v944
        %v947 = vld [vmem:[#allocation6] sm:$0xff]
        %v948 = vld [vmem:[#allocation6 + $0x8] sm:$0xff]
        %v949 = vld [vmem:[#allocation6 + $0x10] sm:$0xff]
        %v950 = vld [vmem:[#allocation6 + $0x18] sm:$0xff]
        %v951 = vld [vmem:[#allocation6 + $0x20] sm:$0xff]
        %v952 = vld [vmem:[#allocation6 + $0x28] sm:$0xff]
        %v953 = vld [vmem:[#allocation6 + $0x30] sm:$0xff]
        %v954 = vld [vmem:[#allocation6 + $0x38] sm:$0xff]
        %v956 = vrot.slane %v944, 5
        %v957 = vsel %vm425, %v956, 0
        %959 = vmatprep.subr.mxu0 0.0
        %960 = vmatpush1.msra.mxu0 %v947
        %961 = vmatprep.subr.mxu0 0.0
        %962 = vmatpush1.msra.mxu0 %v948
        %963 = vmatprep.subr.mxu0 0.0
        %964 = vmatpush1.msra.mxu0 %v949
        %965 = vmatprep.subr.mxu0 0.0
        %966 = vmatpush1.msra.mxu0 %v950
        %967 = vmatprep.subr.mxu0 0.0
        %968 = vmatpush1.msra.mxu0 %v951
        %969 = vmatprep.subr.mxu0 0.0
        %970 = vmatpush1.msra.mxu0 %v952
        %971 = vmatprep.subr.mxu0 0.0
        %972 = vmatpush1.msra.mxu0 %v953
        %973 = vmatprep.subr.mxu0 0.0
        %974 = vmatpush1.msra.mxu0 %v954
        %975 = vmatprep.subr.mxu0 0.0
        %976 = vmatpush1.msra.mxu0 0.0
        %977 = vmatprep.subr.mxu0 0.0
        %978 = vmatpush1.msra.mxu0 0.0
        %979 = vmatprep.subr.mxu0 0.0
        %980 = vmatpush1.msra.mxu0 0.0
        %981 = vmatprep.subr.mxu0 0.0
        %982 = vmatpush1.msra.mxu0 0.0
        %983 = vmatprep.subr.mxu0 0.0
        %984 = vmatpush1.msra.mxu0 0.0
        %985 = vmatprep.subr.mxu0 0.0
        %986 = vmatpush1.msra.mxu0 0.0
        %987 = vmatprep.subr.mxu0 0.0
        %988 = vmatpush1.msra.mxu0 0.0
        %989 = vmatprep.subr.mxu0 0.0
        %990 = vmatpush1.msra.mxu0 0.0
        %991 = vmatprep.subr.mxu0 0.0
        %992 = vmatpush1.msra.mxu0 0.0
        %993 = vmatprep.subr.mxu0 0.0
        %994 = vmatpush1.msra.mxu0 0.0
        %995 = vmatprep.subr.mxu0 0.0
        %996 = vmatpush1.msra.mxu0 0.0
        %997 = vmatprep.subr.mxu0 0.0
        %998 = vmatpush1.msra.mxu0 0.0
        %999 = vmatprep.subr.mxu0 0.0
        %1000 = vmatpush1.msra.mxu0 0.0
        %1001 = vmatprep.subr.mxu0 0.0
        %1002 = vmatpush1.msra.mxu0 0.0
        %1003 = vmatprep.subr.mxu0 0.0
        %1004 = vmatpush1.msra.mxu0 0.0
        %1005 = vmatprep.subr.mxu0 0.0
        %1006 = vmatpush1.msra.mxu0 0.0
        %1007 = vmatprep.subr.mxu0 0.0
        %1008 = vmatpush1.msra.mxu0 0.0
        %1009 = vmatprep.subr.mxu0 0.0
        %1010 = vmatpush1.msra.mxu0 0.0
        %1011 = vmatprep.subr.mxu0 0.0
        %1012 = vmatpush1.msra.mxu0 0.0
        %1013 = vmatprep.subr.mxu0 0.0
        %1014 = vmatpush1.msra.mxu0 0.0
        %1015 = vmatprep.subr.mxu0 0.0
        %1016 = vmatpush1.msra.mxu0 0.0
        %1017 = vmatprep.subr.mxu0 0.0
        %1018 = vmatpush1.msra.mxu0 0.0
        %1019 = vmatprep.subr.mxu0 0.0
        %1020 = vmatpush1.msra.mxu0 0.0
        %1021 = vmatprep.subr.mxu0 0.0
        %1022 = vmatpush1.msra.mxu0 0.0
        %1023 = vmatprep.mubr.f32.mxu0 0.0
        %1024 = vmatmul.mubr.f32.gmra.mrb[0].mxu0 %v957
        %v1025 = vpop.f32.mrb[0].mxu0
        %v1026 = vadd.f32 0.0, %v1025
        %v1027 = vpop.f32.mrb[0].mxu0
        %1028 = vdwg.mxu0
        %v1030 = vrot.slane %v1026, 2
        %v1032 = vadd.f32 %v413, %v1030
        %v1033 = vtanh.pop %v1032
        %vm1034 = vcmask 522246
        %1035 = vst.msk [vmem:[#allocation2] sm:$0x40] %vm1034, %v1033
        %v1036 = vld [vmem:[#allocation6] sm:$0xff]
        %v1037 = vld [vmem:[#allocation6 + $0x8] sm:$0xff]
        %v1038 = vld [vmem:[#allocation6 + $0x10] sm:$0xff]
        %v1039 = vld [vmem:[#allocation6 + $0x18] sm:$0xff]
        %v1040 = vld [vmem:[#allocation6 + $0x20] sm:$0xff]
        %v1041 = vld [vmem:[#allocation6 + $0x28] sm:$0xff]
        %v1042 = vld [vmem:[#allocation6 + $0x30] sm:$0xff]
        %v1043 = vld [vmem:[#allocation6 + $0x38] sm:$0xff]
        %v1045 = vrot.slane %v1033, 6
        %v1046 = vsel %vm425, %v1045, 0
        %1048 = vmatprep.subr.mxu0 0.0
        %1049 = vmatpush1.msra.mxu0 %v1036
        %1050 = vmatprep.subr.mxu0 0.0
        %1051 = vmatpush1.msra.mxu0 %v1037
        %1052 = vmatprep.subr.mxu0 0.0
        %1053 = vmatpush1.msra.mxu0 %v1038
        %1054 = vmatprep.subr.mxu0 0.0
        %1055 = vmatpush1.msra.mxu0 %v1039
        %1056 = vmatprep.subr.mxu0 0.0
        %1057 = vmatpush1.msra.mxu0 %v1040
        %1058 = vmatprep.subr.mxu0 0.0
        %1059 = vmatpush1.msra.mxu0 %v1041
        %1060 = vmatprep.subr.mxu0 0.0
        %1061 = vmatpush1.msra.mxu0 %v1042
        %1062 = vmatprep.subr.mxu0 0.0
        %1063 = vmatpush1.msra.mxu0 %v1043
        %1064 = vmatprep.subr.mxu0 0.0
        %1065 = vmatpush1.msra.mxu0 0.0
        %1066 = vmatprep.subr.mxu0 0.0
        %1067 = vmatpush1.msra.mxu0 0.0
        %1068 = vmatprep.subr.mxu0 0.0
        %1069 = vmatpush1.msra.mxu0 0.0
        %1070 = vmatprep.subr.mxu0 0.0
        %1071 = vmatpush1.msra.mxu0 0.0
        %1072 = vmatprep.subr.mxu0 0.0
        %1073 = vmatpush1.msra.mxu0 0.0
        %1074 = vmatprep.subr.mxu0 0.0
        %1075 = vmatpush1.msra.mxu0 0.0
        %1076 = vmatprep.subr.mxu0 0.0
        %1077 = vmatpush1.msra.mxu0 0.0
        %1078 = vmatprep.subr.mxu0 0.0
        %1079 = vmatpush1.msra.mxu0 0.0
        %1080 = vmatprep.subr.mxu0 0.0
        %1081 = vmatpush1.msra.mxu0 0.0
        %1082 = vmatprep.subr.mxu0 0.0
        %1083 = vmatpush1.msra.mxu0 0.0
        %1084 = vmatprep.subr.mxu0 0.0
        %1085 = vmatpush1.msra.mxu0 0.0
        %1086 = vmatprep.subr.mxu0 0.0
        %1087 = vmatpush1.msra.mxu0 0.0
        %1088 = vmatprep.subr.mxu0 0.0
        %1089 = vmatpush1.msra.mxu0 0.0
        %1090 = vmatprep.subr.mxu0 0.0
        %1091 = vmatpush1.msra.mxu0 0.0
        %1092 = vmatprep.subr.mxu0 0.0
        %1093 = vmatpush1.msra.mxu0 0.0
        %1094 = vmatprep.subr.mxu0 0.0
        %1095 = vmatpush1.msra.mxu0 0.0
        %1096 = vmatprep.subr.mxu0 0.0
        %1097 = vmatpush1.msra.mxu0 0.0
        %1098 = vmatprep.subr.mxu0 0.0
        %1099 = vmatpush1.msra.mxu0 0.0
        %1100 = vmatprep.subr.mxu0 0.0
        %1101 = vmatpush1.msra.mxu0 0.0
        %1102 = vmatprep.subr.mxu0 0.0
        %1103 = vmatpush1.msra.mxu0 0.0
        %1104 = vmatprep.subr.mxu0 0.0
        %1105 = vmatpush1.msra.mxu0 0.0
        %1106 = vmatprep.subr.mxu0 0.0
        %1107 = vmatpush1.msra.mxu0 0.0
        %1108 = vmatprep.subr.mxu0 0.0
        %1109 = vmatpush1.msra.mxu0 0.0
        %1110 = vmatprep.subr.mxu0 0.0
        %1111 = vmatpush1.msra.mxu0 0.0
        %1112 = vmatprep.mubr.f32.mxu0 0.0
        %1113 = vmatmul.mubr.f32.gmra.mrb[0].mxu0 %v1046
        %v1114 = vpop.f32.mrb[0].mxu0
        %v1115 = vadd.f32 0.0, %v1114
        %v1116 = vpop.f32.mrb[0].mxu0
        %1117 = vdwg.mxu0
        %v1119 = vrot.slane %v1115, 1
        %v1121 = vadd.f32 %v413, %v1119
        %v1122 = vtanh.pop %v1121
        %vm1123 = vcmask 523271
        %1124 = vst.msk [vmem:[#allocation2] sm:$0x80] %vm1123, %v1122
        %v1125 = vld [vmem:[#allocation2] sm:$0xff]
        %v1126 = vld [vmem:[#allocation8] sm:$0xff]
        %v1127 = vld [vmem:[#allocation8 + $0x8] sm:$0xff]
        %v1128 = vld [vmem:[#allocation8 + $0x10] sm:$0xff]
        %v1129 = vld [vmem:[#allocation8 + $0x18] sm:$0xff]
        %v1130 = vld [vmem:[#allocation8 + $0x20] sm:$0xff]
        %v1131 = vld [vmem:[#allocation8 + $0x28] sm:$0xff]
        %v1132 = vld [vmem:[#allocation8 + $0x30] sm:$0xff]
        %v1133 = vld [vmem:[#allocation8 + $0x38] sm:$0xff]
        %v1134 = vld [vmem:[%s6] sm:$0x1]
        %v1136 = vlaneseq
        %v1137 = vshrl.u32 %v1136, 7
        %v1138 = vsub.s32 0, %v1137
        %v1139 = vrot.slane %v1134, %v1138
        %v1142 = vsel %vm425, %v1125, 0
        %1144 = vmatprep.subr.mxu0 0.0
        %1145 = vmatpush1.msra.mxu0 %v1126
        %1146 = vmatprep.subr.mxu0 0.0
        %1147 = vmatpush1.msra.mxu0 %v1127
        %1148 = vmatprep.subr.mxu0 0.0
        %1149 = vmatpush1.msra.mxu0 %v1128
        %1150 = vmatprep.subr.mxu0 0.0
        %1151 = vmatpush1.msra.mxu0 %v1129
        %1152 = vmatprep.subr.mxu0 0.0
        %1153 = vmatpush1.msra.mxu0 %v1130
        %1154 = vmatprep.subr.mxu0 0.0
        %1155 = vmatpush1.msra.mxu0 %v1131
        %1156 = vmatprep.subr.mxu0 0.0
        %1157 = vmatpush1.msra.mxu0 %v1132
        %1158 = vmatprep.subr.mxu0 0.0
        %1159 = vmatpush1.msra.mxu0 %v1133
        %1160 = vmatprep.subr.mxu0 0.0
        %1161 = vmatpush1.msra.mxu0 0.0
        %1162 = vmatprep.subr.mxu0 0.0
        %1163 = vmatpush1.msra.mxu0 0.0
        %1164 = vmatprep.subr.mxu0 0.0
        %1165 = vmatpush1.msra.mxu0 0.0
        %1166 = vmatprep.subr.mxu0 0.0
        %1167 = vmatpush1.msra.mxu0 0.0
        %1168 = vmatprep.subr.mxu0 0.0
        %1169 = vmatpush1.msra.mxu0 0.0
        %1170 = vmatprep.subr.mxu0 0.0
        %1171 = vmatpush1.msra.mxu0 0.0
        %1172 = vmatprep.subr.mxu0 0.0
        %1173 = vmatpush1.msra.mxu0 0.0
        %1174 = vmatprep.subr.mxu0 0.0
        %1175 = vmatpush1.msra.mxu0 0.0
        %1176 = vmatprep.subr.mxu0 0.0
        %1177 = vmatpush1.msra.mxu0 0.0
        %1178 = vmatprep.subr.mxu0 0.0
        %1179 = vmatpush1.msra.mxu0 0.0
        %1180 = vmatprep.subr.mxu0 0.0
        %1181 = vmatpush1.msra.mxu0 0.0
        %1182 = vmatprep.subr.mxu0 0.0
        %1183 = vmatpush1.msra.mxu0 0.0
        %1184 = vmatprep.subr.mxu0 0.0
        %1185 = vmatpush1.msra.mxu0 0.0
        %1186 = vmatprep.subr.mxu0 0.0
        %1187 = vmatpush1.msra.mxu0 0.0
        %1188 = vmatprep.subr.mxu0 0.0
        %1189 = vmatpush1.msra.mxu0 0.0
        %1190 = vmatprep.subr.mxu0 0.0
        %1191 = vmatpush1.msra.mxu0 0.0
        %1192 = vmatprep.subr.mxu0 0.0
        %1193 = vmatpush1.msra.mxu0 0.0
        %1194 = vmatprep.subr.mxu0 0.0
        %1195 = vmatpush1.msra.mxu0 0.0
        %1196 = vmatprep.subr.mxu0 0.0
        %1197 = vmatpush1.msra.mxu0 0.0
        %1198 = vmatprep.subr.mxu0 0.0
        %1199 = vmatpush1.msra.mxu0 0.0
        %1200 = vmatprep.subr.mxu0 0.0
        %1201 = vmatpush1.msra.mxu0 0.0
        %1202 = vmatprep.subr.mxu0 0.0
        %1203 = vmatpush1.msra.mxu0 0.0
        %1204 = vmatprep.subr.mxu0 0.0
        %1205 = vmatpush1.msra.mxu0 0.0
        %1206 = vmatprep.subr.mxu0 0.0
        %1207 = vmatpush1.msra.mxu0 0.0
        %1208 = vmatprep.mubr.f32.mxu0 0.0
        %1209 = vmatmul.mubr.f32.gmra.mrb[0].mxu0 %v1142
        %v1210 = vpop.f32.mrb[0].mxu0
        %v1211 = vadd.f32 %v1139, %v1210
        %v1212 = vpop.f32.mrb[0].mxu0
        %1213 = vdwg.mxu0
        %1214 = vst [vmem:[%s313] sm:$0xff] %v1211
        %s1215 = sand.u32 %s183, 1
        %s1216 = scalar_lea.sflag [#allocation5], %s1215
        %s1217 = sand.u32 %s183, 1
        %s1218 = smul.addr %s1217, 8
        %s1219 = scalar_lea.vmem [#allocation9], %s1218
        // Predicated region
        $region61: #{makemore_rnn_forward.1} parent=47 // pred_check
          %p1220 = pneg %p193
        $region62: #{makemore_rnn_forward.1} parent=47 // pred_check_branch
          %1222 = sbr.rel (%p1220) target = $region64
        $region63: #{makemore_rnn_forward.1} parent=47 // pred_region
          %s1224 = ssub.s32 128, 128
          %1225 = vsyncadd %s1216, %s1224
          %s1226 = smul.addr %s23, 128
          %s1227 = scalar_lea.hbm %s7, %s1226
          %s1229 = sshll.u32 %s1219, 4
          %s1230 = int_to_ptr.vmem [resolvable:$true] %s1229
          %1232 = dma.vmem_to_hbm [thread:$0]  %s1230, 128, %s1227, %s1216
        $region64: #{makemore_rnn_forward.1} parent=47 // pred_fallthru
          _
      $region48: #{makemore_rnn_forward.1} parent=5 // pred_fallthru
        _
      %p1233 = scmp.le.s32.totalorder 2, %s18
      // Predicated region
      $region65: #{makemore_rnn_forward.1} parent=5 // pred_check
        %p1234 = pneg %p1233
      $region66: #{makemore_rnn_forward.1} parent=5 // pred_check_branch
        %1236 = sbr.rel (%p1234) target = $region68
      $region67: #{makemore_rnn_forward.1} parent=5 // pred_region
        %s1237 = ssub.s32 %s18, 2
        // Predicated region
        $region69: #{makemore_rnn_forward.1} parent=67 // pred_check
          %p1238 = pneg %p199
        $region70: #{makemore_rnn_forward.1} parent=67 // pred_check_branch
          %1240 = sbr.rel (%p1238) target = $region72
        $region71: #{makemore_rnn_forward.1} parent=67 // pred_region
          %s1241 = sand.u32 %s184, 1
          %s1242 = scalar_lea.sflag [#allocation5], %s1241
          %s1243 = sand.u32 %s184, 1
          %s1244 = smul.addr %s1243, 8
          %s1245 = scalar_lea.vmem [#allocation9], %s1244
          %1246 = dma.done %s1242, 128
        $region72: #{makemore_rnn_forward.1} parent=67 // pred_fallthru
          _
      $region68: #{makemore_rnn_forward.1} parent=5 // pred_fallthru
        _
    $region6: #{makemore_rnn_forward.1} parent=1 // loop_footer
      %s22 = sadd.s32 1, %s18
    $region7: #{makemore_rnn_forward.1} parent=1 // loop_footer_branch
      %17 = sbr.rel target = $region3
    $region8: #{makemore_rnn_forward.1} parent=1 // loop_exit
      _
    %1247 = vsyncpa [#allocation4], 1
    %s1248 = scalar_lea.sflag [#allocation4], 1
    %1249 = vsyncpa %s1248, 1
    %1250 = vsyncpa [#allocation7], 1
    %1251 = vsyncpa [#allocation5], 1
    %s1252 = scalar_lea.sflag [#allocation5], 1
    %1253 = vsyncpa %s1252, 1

</llo_original>
